<compile_context>
chip_gen: v6e
topology: v6e:2x2x1
jax: 0.10.0
libtpu: 0.0.40
codegen_flags: <defaults>
</compile_context>

<pallas_src>
import numpy as np
import jax
import jax.numpy as jnp
from jax.experimental import pallas as pl
from jax.experimental.pallas import tpu as pltpu

# transition-system constants
SHIFT, REDUCE_L, REDUCE_R = 0, 1, 2

# ---------------- configuration (small, consistent with the module) ----------
NLAYERS = 1
LSTM_DIM = 32
WORD_DIM = 16
PRETRAIN_WORD_DIM = 16
POS_DIM = 8
ACTION_DIM = LSTM_DIM          # original code requires action_dim == lstm_dim
DROPOUT = 0.0                  # TODO(synk): stochastic dropout path not reproduced (dropout=0 config)
LEN_WORD = 6
LEN_POS = 4
LEN_ACT = 3
WI2CI = {0: 0, 1: 0, 2: 0, 3: 1, 4: 1, 5: 1}
WI2I = {0: 0, 1: 1, 2: 2, 3: 0, 4: 1, 5: 2}
CI2WI = {0: [0, 1, 2], 1: [3, 4, 5]}
LEN_CLUSTER = len(CI2WI)

# packed output-head lane layout: [act | pos | cluster | word_c0 | word_c1 | pad]
OFF_ACT = 0
OFF_POS = OFF_ACT + LEN_ACT
OFF_CLUSTER = OFF_POS + LEN_POS
OFF_WORD = {}
_off = OFF_CLUSTER + LEN_CLUSTER
for _c in sorted(CI2WI):
    OFF_WORD[_c] = _off
    _off += len(CI2WI[_c])
PACK = 128
assert _off <= PACK

# host-precomputed schedule columns
(COL_ACTION, COL_ACT_FLAG, COL_SHIFT_FLAG, COL_BUF_IDX, COL_STACK_REP,
 COL_STATE_IDX, COL_SHIFT_X, COL_HEAD, COL_MOD, COL_POS_TGT, COL_CL_TGT,
 COL_WORD_TGT, COL_WORD_LO, COL_WORD_HI) = range(14)
NCOL = 14

_NEG = -1e30
VMEM_SPEC = pl.BlockSpec(memory_space=pltpu.MemorySpace.VMEM)


# ---------------------------- shared in-kernel LSTM cell ----------------------
def _lstm_cell(x, h, c, w_ref, b_ref):
    """Per-gate fused [x; h] LSTM cell. w_ref: (4, 2H, H), b_ref: (4, H)."""
    f32 = jnp.float32
    xh = jnp.concatenate([x, h], axis=1)                         # (1, 2H)

    def pre(g):
        return (jnp.dot(xh, w_ref[g], preferred_element_type=f32)
                + b_ref[g:g + 1, :])

    i_g = jax.nn.sigmoid(pre(0))
    f_g = jax.nn.sigmoid(pre(1))
    g_g = jnp.tanh(pre(2))
    o_g = jax.nn.sigmoid(pre(3))
    c_new = f_g * c + i_g * g_g
    h_new = o_g * jnp.tanh(c_new)
    return h_new, c_new


# ---------------------------- encode kernel -----------------------------------
def _encode_kernel(we_ref, pe_ref, wpw_ref, wpb_ref, ipw_w_ref, ipw_p_ref,
                   w_ref, b_ref, inp_out_ref, buf_out_ref,
                   xg0, xg1, xg2, xg3):
    f32 = jnp.float32
    H = LSTM_DIM

    # word_proj + relu; input_proj (bias-free, concat expressed as sum of 2 dots) + relu
    iw = jnp.maximum(
        jnp.dot(we_ref[...], wpw_ref[...], preferred_element_type=f32)
        + wpb_ref[...], 0.0)
    inp = jnp.maximum(
        jnp.dot(iw, ipw_w_ref[...], preferred_element_type=f32)
        + jnp.dot(pe_ref[...], ipw_p_ref[...], preferred_element_type=f32),
        0.0)                                                     # (T, H)
    inp_out_ref[...] = inp

    # precompute x-side gate pre-activations for all T timesteps (one matmul per gate)
    xg_refs = (xg0, xg1, xg2, xg3)
    wh = []
    for g in range(4):
        wg = w_ref[g]                                            # (2H, H)
        xg_refs[g][...] = (jnp.dot(inp, wg[:H, :], preferred_element_type=f32)
                           + b_ref[g:g + 1, :])
        wh.append(wg[H:, :])                                     # (H, H)

    T = inp.shape[0]

    def step(t, carry):
        h, c = carry
        pre = [xg_refs[g][pl.ds(t, 1), :]
               + jnp.dot(h, wh[g], preferred_element_type=f32) for g in range(4)]
        i_g = jax.nn.sigmoid(pre[0])
        f_g = jax.nn.sigmoid(pre[1])
        g_g = jnp.tanh(pre[2])
        o_g = jax.nn.sigmoid(pre[3])
        c_new = f_g * c + i_g * g_g
        h_new = o_g * jnp.tanh(c_new)
        buf_out_ref[pl.ds(t, 1), :] = h_new
        return (h_new, c_new)

    h0 = jnp.zeros((1, H), f32)
    c0 = jnp.zeros((1, H), f32)
    jax.lax.fori_loop(0, T, step, (h0, c0), unroll=True)


def encode_sentence(params, word_emb, pos_emb):
    T = word_emb.shape[0]
    H = LSTM_DIM
    out_shape = (jax.ShapeDtypeStruct((T, H), jnp.float32),
                 jax.ShapeDtypeStruct((T, H), jnp.float32))
    return pl.pallas_call(
        _encode_kernel,
        out_shape=out_shape,
        in_specs=[VMEM_SPEC] * 8,
        out_specs=(VMEM_SPEC, VMEM_SPEC),
        scratch_shapes=[pltpu.VMEM((T, H), jnp.float32) for _ in range(4)],
    )(word_emb, pos_emb,
      params["word_proj_w"], params["word_proj_b"],
      params["input_proj_w"][:WORD_DIM, :], params["input_proj_w"][WORD_DIM:, :],
      params["buffer_rnn_w"], params["buffer_rnn_b"])


# ---------------------------- fused decode kernel ------------------------------
def _decode_kernel(sched_ref,
                   inp_ref, buf_ref, empty_stack_ref, empty_buf_ref, empty_act_ref,
                   mlp_w_ref, mlp_b_ref, head_w_ref, head_b_ref,
                   comp_w_ref, comp_b_ref, act_tbl_ref,
                   act_w_ref, act_b_ref, stk_w_ref, stk_b_ref,
                   out_ref,
                   stack_h, stack_c, act_h, act_c, act_sum):
    f32 = jnp.float32
    i = pl.program_id(0)

    @pl.when(i == 0)
    def _init():
        stack_h[...] = jnp.zeros_like(stack_h)
        stack_c[...] = jnp.zeros_like(stack_c)
        act_h[...] = jnp.zeros_like(act_h)
        act_c[...] = jnp.zeros_like(act_c)
        act_sum[...] = empty_act_ref[...]
        out_ref[...] = jnp.zeros_like(out_ref)

    # -------- schedule scalars (SMEM, scalar-prefetched) --------
    action = sched_ref[i, COL_ACTION]
    act_flag = sched_ref[i, COL_ACT_FLAG].astype(f32)
    shift_flg = sched_ref[i, COL_SHIFT_FLAG]
    buf_idx = sched_ref[i, COL_BUF_IDX]
    srep_idx = sched_ref[i, COL_STACK_REP]
    state_idx = sched_ref[i, COL_STATE_IDX]
    shx_idx = sched_ref[i, COL_SHIFT_X]
    head_idx = sched_ref[i, COL_HEAD]
    mod_idx = sched_ref[i, COL_MOD]
    pos_tgt = sched_ref[i, COL_POS_TGT]
    cl_tgt = sched_ref[i, COL_CL_TGT]
    w_tgt = sched_ref[i, COL_WORD_TGT]
    w_lo = sched_ref[i, COL_WORD_LO]
    w_hi = sched_ref[i, COL_WORD_HI]

    def row(ref, idx):
        return ref[pl.ds(jnp.maximum(idx, 0), 1), :]

    def blend(use_a, a, b):
        # use_a: traced scalar bool; a, b: finite (1, K) f32
        s = use_a.astype(f32)
        return s * a + (1.0 - s) * b

    # -------- parser state -> mlp (concat expressed as sum of 3 matmuls) --------
    stack_emb = blend(srep_idx < 0, empty_stack_ref[...], row(stack_h, srep_idx))
    buf_emb = blend(buf_idx < 0, empty_buf_ref[...], row(buf_ref, buf_idx))
    a_sum = act_sum[...]
    h = jnp.maximum(
        jnp.dot(stack_emb, mlp_w_ref[0], preferred_element_type=f32)
        + jnp.dot(buf_emb, mlp_w_ref[1], preferred_element_type=f32)
        + jnp.dot(a_sum, mlp_w_ref[2], preferred_element_type=f32)
        + mlp_b_ref[...], 0.0)

    # -------- packed output heads + segmented log-softmax NLLs --------
    logits = jnp.dot(h, head_w_ref[...], preferred_element_type=f32) + head_b_ref[...]
    lane = jax.lax.broadcasted_iota(jnp.int32, logits.shape, 1)

    def seg_nll(lo, hi, tgt):
        mask = (lane >= lo) & (lane < hi)
        x = jnp.where(mask, logits, _NEG)
        m = jnp.max(x, axis=-1, keepdims=True)
        lse = m + jnp.log(jnp.sum(jnp.exp(x - m), axis=-1, keepdims=True))
        picked = jnp.sum(jnp.where(lane == tgt, logits, 0.0), axis=-1, keepdims=True)
        return lse - picked                                       # (1, 1)

    nll_act = seg_nll(OFF_ACT, OFF_ACT + LEN_ACT, action)
    nll_pos = seg_nll(OFF_POS, OFF_POS + LEN_POS, pos_tgt)
    nll_cl = seg_nll(OFF_CLUSTER, OFF_CLUSTER + LEN_CLUSTER, cl_tgt)
    nll_wrd = seg_nll(w_lo, w_hi, w_tgt)

    shift_f = shift_flg.astype(f32)
    out_ref[...] = out_ref[...] + (
        jnp.where(lane == 0, act_flag * nll_act, 0.0)
        + jnp.where(lane == 1, shift_f * (nll_pos + nll_cl + nll_wrd), 0.0))

    # -------- action RNN (parser state above used the pre-update summary) -------
    x_act = act_tbl_ref[pl.ds(action, 1), :]
    a_h, a_c = _lstm_cell(x_act, act_h[...], act_c[...], act_w_ref, act_b_ref)
    act_h[...] = a_h
    act_c[...] = a_c
    act_sum[...] = a_h

    # -------- stack RNN (SHIFT pushes token embedding, REDUCE pushes comp) ------
    shift_x = row(inp_ref, shx_idx)
    head_rep = row(stack_h, head_idx)
    mod_rep = row(stack_h, mod_idx)
    composed = jnp.maximum(
        jnp.dot(head_rep, comp_w_ref[0], preferred_element_type=f32)
        + jnp.dot(mod_rep, comp_w_ref[1], preferred_element_type=f32)
        + comp_b_ref[...], 0.0)
    x_stack = blend(shift_flg > 0, shift_x, composed)
    zero = jnp.zeros_like(shift_x)
    h_in = blend(state_idx < 0, zero, row(stack_h, state_idx))
    c_in = blend(state_idx < 0, zero, row(stack_c, state_idx))
    s_h, s_c = _lstm_cell(x_stack, h_in, c_in, stk_w_ref, stk_b_ref)
    stack_h[pl.ds(i, 1), :] = s_h
    stack_c[pl.ds(i, 1), :] = s_c


def run_decode(sched, input_sent, buffer_sent, params, packed):
    H = LSTM_DIM
    N = int(sched.shape[0])

    arrays = (
        input_sent, buffer_sent,
        params["empty_stack_emb"], params["empty_buffer_emb"], params["empty_act_emb"],
        packed["mlp_w3"], params["mlp_b"],
        packed["head_w"], packed["head_b"],
        packed["comp_w2"], params["comp_b"],
        packed["act_tbl"],
        params["act_rnn_w"], params["act_rnn_b"],
        params["stack_rnn_w"], params["stack_rnn_b"],
    )

    def full_block(shape):
        nd = len(shape)
        return pl.BlockSpec(shape, lambda *_: (0,) * nd)   # constant block -> VMEM resident

    grid_spec = pltpu.PrefetchScalarGridSpec(
        num_scalar_prefetch=1,
        grid=(N,),
        in_specs=[full_block(a.shape) for a in arrays],
        out_specs=pl.BlockSpec((1, PACK), lambda i, s: (0, 0)),
        scratch_shapes=[
            pltpu.VMEM((N, H), jnp.float32),   # stack_h  (slot j = output of step j)
            pltpu.VMEM((N, H), jnp.float32),   # stack_c
            pltpu.VMEM((1, H), jnp.float32),   # act LSTM h
            pltpu.VMEM((1, H), jnp.float32),   # act LSTM c
            pltpu.VMEM((1, H), jnp.float32),   # act summary
        ],
    )
    return pl.pallas_call(
        _decode_kernel,
        out_shape=jax.ShapeDtypeStruct((1, PACK), jnp.float32),
        grid_spec=grid_spec,
        compiler_params=pltpu.CompilerParams(dimension_semantics=("arbitrary",)),
    )(sched, *arrays)


# ---------------------------- host-side schedule -------------------------------
def build_schedule(words, pos_tags, oracle_actions):
    """Simulates the oracle-driven parser on host and emits the int32 index
    schedule consumed by the fused decode kernel."""
    actions = [int(a) for a in oracle_actions]
    T = len(words)
    n_buf = T
    shifts = 0
    stack = []            # slot (= step) indices
    rows = []
    step = 0
    while not (len(stack) == 1 and n_buf == 0):
        n_valid = (1 if n_buf > 0 else 0) + (2 if len(stack) >= 2 else 0)
        a = actions.pop(0)
        act_flag = 1 if n_valid > 1 else 0
        srep = stack[-1] if stack else -1
        bidx = shifts - 1 if shifts > 0 else -1
        if a == SHIFT:
            tok_w, tok_p = int(words[shifts]), int(pos_tags[shifts])
            c = WI2CI[tok_w]
            intra = WI2I[tok_w]
            shift_flag = 1
            state = stack[-1] if stack else -1
            shx, head, mod = shifts, 0, 0
            pos_t = OFF_POS + tok_p
            cl_t = OFF_CLUSTER + c
            w_lo = OFF_WORD[c]
            w_hi = w_lo + len(CI2WI[c])
            w_t = w_lo + intra
            shifts += 1
            n_buf -= 1
        else:
            right = stack.pop()
            left = stack.pop()
            head, mod = (left, right) if a == REDUCE_R else (right, left)
            state = stack[-1] if stack else -1
            shift_flag = 0
            shx = 0
            pos_t, cl_t = OFF_POS, OFF_CLUSTER
            w_lo = OFF_WORD[0]
            w_hi = w_lo + len(CI2WI[0])
            w_t = w_lo
        rows.append([a, act_flag, shift_flag, bidx, srep, state,
                     shx, head, mod, pos_t, cl_t, w_t, w_lo, w_hi])
        stack.append(step)
        step += 1
    sched = np.asarray(rows, dtype=np.int32)
    has_act = bool(sched[:, COL_ACT_FLAG].any())
    has_tok = bool(sched[:, COL_SHIFT_FLAG].any())
    return sched, has_act, has_tok


# ---------------------------- parameters ---------------------------------------
def init_params(key):
    keys = iter(jax.random.split(key, 64))

    def nrm(shape, scale=0.1):
        return jax.random.normal(next(keys), shape, jnp.float32) * scale

    def lstm_params():
        # per-gate fused [x; h] weights (gate order i, f, g, o)
        return nrm((4, 2 * LSTM_DIM, LSTM_DIM)), nrm((4, LSTM_DIM))

    params = {
        "input_proj_w": nrm((WORD_DIM + POS_DIM, LSTM_DIM)),        # bias-free
        "comp_w": nrm((2 * LSTM_DIM, LSTM_DIM)), "comp_b": nrm((1, LSTM_DIM)),
        "mlp_w": nrm((3 * LSTM_DIM, LSTM_DIM)), "mlp_b": nrm((1, LSTM_DIM)),
        "act_output_w": nrm((LSTM_DIM, LEN_ACT)), "act_output_b": nrm((1, LEN_ACT)),
        "word_proj_w": nrm((PRETRAIN_WORD_DIM, WORD_DIM)), "word_proj_b": nrm((1, WORD_DIM)),
        "word_embedding": nrm((LEN_WORD, PRETRAIN_WORD_DIM), 1.0),
        "pos_embedding": nrm((LEN_POS, POS_DIM), 1.0),
        "act_embedding": nrm((LEN_ACT, ACTION_DIM), 1.0),
        "pos_output_w": nrm((LSTM_DIM, LEN_POS)), "pos_output_b": nrm((1, LEN_POS)),
        "cluster_output_w": nrm((LSTM_DIM, LEN_CLUSTER)), "cluster_output_b": nrm((1, LEN_CLUSTER)),
        "word_output_l": [{"w": nrm((LSTM_DIM, len(CI2WI[c]))),
                           "b": nrm((1, len(CI2WI[c])))} for c in sorted(CI2WI)],
        "act_proj_w": nrm((ACTION_DIM, LSTM_DIM)), "act_proj_b": nrm((1, LSTM_DIM)),
        "empty_buffer_emb": nrm((1, LSTM_DIM), 1.0),
        "empty_stack_emb": nrm((1, LSTM_DIM), 1.0),
    }
    params["buffer_rnn_w"], params["buffer_rnn_b"] = lstm_params()
    params["stack_rnn_w"], params["stack_rnn_b"] = lstm_params()
    params["act_rnn_w"], params["act_rnn_b"] = lstm_params()
    # original: empty_act_emb = nn.Parameter(empty_buffer_emb)  (shared values)
    params["empty_act_emb"] = params["empty_buffer_emb"]
    return params


def pack_decode_params(params):
    H = LSTM_DIM
    f32 = jnp.float32
    head_w = jnp.zeros((H, PACK), f32)
    head_b = jnp.zeros((1, PACK), f32)
    head_w = head_w.at[:, OFF_ACT:OFF_ACT + LEN_ACT].set(params["act_output_w"])
    head_b = head_b.at[:, OFF_ACT:OFF_ACT + LEN_ACT].set(params["act_output_b"])
    head_w = head_w.at[:, OFF_POS:OFF_POS + LEN_POS].set(params["pos_output_w"])
    head_b = head_b.at[:, OFF_POS:OFF_POS + LEN_POS].set(params["pos_output_b"])
    head_w = head_w.at[:, OFF_CLUSTER:OFF_CLUSTER + LEN_CLUSTER].set(params["cluster_output_w"])
    head_b = head_b.at[:, OFF_CLUSTER:OFF_CLUSTER + LEN_CLUSTER].set(params["cluster_output_b"])
    for c in sorted(CI2WI):
        lo, n = OFF_WORD[c], len(CI2WI[c])
        head_w = head_w.at[:, lo:lo + n].set(params["word_output_l"][c]["w"])
        head_b = head_b.at[:, lo:lo + n].set(params["word_output_l"][c]["b"])
    return {
        "head_w": head_w, "head_b": head_b,
        "mlp_w3": params["mlp_w"].reshape(3, H, H),
        "comp_w2": params["comp_w"].reshape(2, H, H),
        # action embedding already pushed through act_proj (3, H) -> row lookup in-kernel
        "act_tbl": params["act_embedding"] @ params["act_proj_w"] + params["act_proj_b"],
    }


# ---------------------------- forward pass --------------------------------------
def decoder_forward(params, words, pos_tags, oracle_actions):
    """Reproduces Decoder.forward for batch=1 (words/pos_tags are python int lists)."""
    assert len(words) == len(pos_tags)
    sched_np, has_act, has_tok = build_schedule(words, pos_tags, oracle_actions)

    # embedding gathers (tiny, plain XLA)
    word_emb = params["word_embedding"][jnp.asarray(words, jnp.int32)]
    pos_emb = params["pos_embedding"][jnp.asarray(pos_tags, jnp.int32)]
    input_sent, buffer_sent = encode_sentence(params, word_emb, pos_emb)

    packed = pack_decode_params(params)
    loss_vec = run_decode(jnp.asarray(sched_np), input_sent, buffer_sent, params, packed)

    loss_act = loss_vec[0, 0] if has_act else None
    loss_token = loss_vec[0, 1] if has_tok else None
    loss = loss_token if loss_act is None else loss_token + loss_act
    return loss, loss_act, loss_token


# ---------------------------- pure-JAX reference (for in-script check) ----------
_P = jax.lax.Precision.HIGHEST


def reference_forward(params, words, pos_tags, oracle_actions):
    H = LSTM_DIM
    f32 = jnp.float32

    def dense(x, w, b=None, relu=False):
        y = jnp.dot(x, w, precision=_P)
        if b is not None:
            y = y + b
        return jnp.maximum(y, 0.0) if relu else y

    def lstm(x, h, c, w, b):
        xh = jnp.concatenate([x, h], axis=1)
        pre = [jnp.dot(xh, w[g], precision=_P) + b[g:g + 1, :] for g in range(4)]
        i = jax.nn.sigmoid(pre[0]); f = jax.nn.sigmoid(pre[1])
        g_ = jnp.tanh(pre[2]); o = jax.nn.sigmoid(pre[3])
        c2 = f * c + i * g_
        return o * jnp.tanh(c2), c2

    T = len(words)
    we = params["word_embedding"][jnp.asarray(words, jnp.int32)]
    iw = dense(we, params["word_proj_w"], params["word_proj_b"], relu=True)
    pe = params["pos_embedding"][jnp.asarray(pos_tags, jnp.int32)]
    inp = dense(jnp.concatenate([iw, pe], axis=1), params["input_proj_w"], relu=True)

    h = jnp.zeros((1, H), f32)
    c = jnp.zeros((1, H), f32)
    buffer_sent = []
    for t in range(T):
        h, c = lstm(inp[t:t + 1], h, c, params["buffer_rnn_w"], params["buffer_rnn_b"])
        buffer_sent.append(h)
    input_sent = [inp[t:t + 1] for t in range(T)]

    tokens = [(int(words[t]), int(pos_tags[t])) for t in range(T)]
    input_sent = list(reversed(input_sent))
    buffer_sent = list(reversed(buffer_sent))
    tokens = list(reversed(tokens))

    zero = (jnp.zeros((1, H), f32), jnp.zeros((1, H), f32))
    stack = []
    act_state = zero
    act_summary = params["empty_act_emb"]
    buffer_embedding = params["empty_buffer_emb"]
    oracle = [int(a) for a in oracle_actions]
    loss_act = None
    loss_token = None

    while not (len(stack) == 1 and len(buffer_sent) == 0):
        n_valid = (1 if len(buffer_sent) > 0 else 0) + (2 if len(stack) >= 2 else 0)
        action = oracle.pop(0)

        stack_embedding = params["empty_stack_emb"] if len(stack) == 0 else stack[-1][0]
        parser_state = jnp.concatenate([stack_embedding, buffer_embedding, act_summary], axis=1)
        hh = dense(parser_state, params["mlp_w"], params["mlp_b"], relu=True)

        if n_valid > 1:
            lp = jax.nn.log_softmax(dense(hh, params["act_output_w"], params["act_output_b"]), axis=1)
            cur = -lp[0, action]
            loss_act = cur if loss_act is None else loss_act + cur

        act_in = dense(params["act_embedding"][action:action + 1],
                       params["act_proj_w"], params["act_proj_b"])
        a_h, a_c = lstm(act_in, act_state[0], act_state[1],
                        params["act_rnn_w"], params["act_rnn_b"])
        act_summary, act_state = a_h, (a_h, a_c)

        if action == SHIFT:
            token = tokens.pop()
            lp_pos = jax.nn.log_softmax(dense(hh, params["pos_output_w"], params["pos_output_b"]), axis=1)
            cur = -lp_pos[0, token[1]]
            loss_token = cur if loss_token is None else loss_token + cur
            cw = token[0]
            ci, intra = WI2CI[cw], WI2I[cw]
            lp_cl = jax.nn.log_softmax(dense(hh, params["cluster_output_w"],
                                             params["cluster_output_b"]), axis=1)
            wout = params["word_output_l"][ci]
            lp_w = jax.nn.log_softmax(dense(hh, wout["w"], wout["b"]), axis=1)
            cur = -lp_cl[0, ci] - lp_w[0, intra]
            loss_token = cur if loss_token is None else loss_token + cur

            buffer_embedding = buffer_sent.pop()
            token_embedding = input_sent.pop()
            st = stack[-1][1] if stack else zero
            o_h, o_c = lstm(token_embedding, st[0], st[1],
                            params["stack_rnn_w"], params["stack_rnn_b"])
            stack.append((o_h, (o_h, o_c), token))
        else:
            right = stack.pop()
            left = stack.pop()
            head, mod = (left, right) if action == REDUCE_R else (right, left)
            st = stack[-1][1] if stack else zero
            composed = dense(jnp.concatenate([head[0], mod[0]], axis=1),
                             params["comp_w"], params["comp_b"], relu=True)
            o_h, o_c = lstm(composed, st[0], st[1],
                            params["stack_rnn_w"], params["stack_rnn_b"])
            stack.append((o_h, (o_h, o_c), head[2]))

    loss = loss_token if loss_act is None else loss_token + loss_act
    return loss, loss_act, loss_token


# ---------------------------------- main -----------------------------------------
if __name__ == "__main__":
    key = jax.random.PRNGKey(0)
    params = init_params(key)

    # batch=1, sequence of 4 tokens
    words = [1, 3, 0, 5]
    pos_tags = [0, 2, 1, 3]
    oracle_actions = [SHIFT, SHIFT, REDUCE_R, SHIFT, REDUCE_L, SHIFT, REDUCE_R]

    loss, loss_act, loss_token = decoder_forward(params, words, pos_tags, oracle_actions)
    jax.block_until_ready((loss, loss_act, loss_token))
    assert bool(jnp.isfinite(loss)), "non-finite loss"

    # in-script numerical sanity check against a pure-JAX reference of the module
    ref_loss, ref_la, ref_lt = reference_forward(params, words, pos_tags, oracle_actions)
    for got, ref in ((loss, ref_loss), (loss_act, ref_la), (loss_token, ref_lt)):
        if ref is None:
            assert got is None
            continue
        g, r = float(got), float(ref)
        assert abs(g - r) <= 5e-2 + 2e-2 * abs(r), ("mismatch vs reference", g, r)

    print("KERNEL_OK")
</pallas_src>

<mosaic_0001>
module attributes {stable_mosaic.version = 11 : i64} {
  func.func @_encode_kernel(%arg0: memref<4x16xf32, #tpu.memory_space<vmem>>, %arg1: memref<4x8xf32, #tpu.memory_space<vmem>>, %arg2: memref<16x16xf32, #tpu.memory_space<vmem>>, %arg3: memref<1x16xf32, #tpu.memory_space<vmem>>, %arg4: memref<16x32xf32, #tpu.memory_space<vmem>>, %arg5: memref<8x32xf32, #tpu.memory_space<vmem>>, %arg6: memref<4x64x32xf32, #tpu.memory_space<vmem>>, %arg7: memref<4x32xf32, #tpu.memory_space<vmem>>, %arg8: memref<4x32xf32, #tpu.memory_space<vmem>>, %arg9: memref<4x32xf32, #tpu.memory_space<vmem>>, %arg10: memref<4x32xf32, #tpu.memory_space<vmem>>, %arg11: memref<4x32xf32, #tpu.memory_space<vmem>>, %arg12: memref<4x32xf32, #tpu.memory_space<vmem>>, %arg13: memref<4x32xf32, #tpu.memory_space<vmem>>) attributes {dimension_semantics = [], scalar_prefetch = 0 : i64, scratch_operands = 4 : i64, tpu.core_type = #tpu.core_type<tc>} {
    %c0 = arith.constant 0 : index
    %c0_0 = arith.constant 0 : index
    %0 = vector.load %arg0[%c0, %c0_0] : memref<4x16xf32, #tpu.memory_space<vmem>>, vector<4x16xf32>
    %c0_1 = arith.constant 0 : index
    %c0_2 = arith.constant 0 : index
    %1 = vector.load %arg2[%c0_1, %c0_2] : memref<16x16xf32, #tpu.memory_space<vmem>>, vector<16x16xf32>
    %cst = arith.constant dense<0.000000e+00> : vector<4x16xf32>
    %2 = tpu.matmul %0, %1, %cst {dimension_numbers = #tpu.dot_dimension_numbers<[1], [0], [0], [1], [0, 0, 1, 1], [], []>} : vector<4x16xf32>, vector<16x16xf32>, vector<4x16xf32> -> vector<4x16xf32>
    %c0_3 = arith.constant 0 : index
    %c0_4 = arith.constant 0 : index
    %3 = vector.load %arg3[%c0_3, %c0_4] : memref<1x16xf32, #tpu.memory_space<vmem>>, vector<1x16xf32>
    %4 = vector.broadcast %3 : vector<1x16xf32> to vector<4x16xf32>
    %5 = arith.addf %2, %4 : vector<4x16xf32>
    %cst_5 = arith.constant 0.000000e+00 : f32
    %6 = vector.broadcast %cst_5 : f32 to vector<4x16xf32>
    %7 = arith.maximumf %5, %6 : vector<4x16xf32>
    %c0_6 = arith.constant 0 : index
    %c0_7 = arith.constant 0 : index
    %8 = vector.load %arg4[%c0_6, %c0_7] : memref<16x32xf32, #tpu.memory_space<vmem>>, vector<16x32xf32>
    %cst_8 = arith.constant dense<0.000000e+00> : vector<4x32xf32>
    %9 = tpu.matmul %7, %8, %cst_8 {dimension_numbers = #tpu.dot_dimension_numbers<[1], [0], [0], [1], [0, 0, 1, 1], [], []>} : vector<4x16xf32>, vector<16x32xf32>, vector<4x32xf32> -> vector<4x32xf32>
    %c0_9 = arith.constant 0 : index
    %c0_10 = arith.constant 0 : index
    %10 = vector.load %arg1[%c0_9, %c0_10] : memref<4x8xf32, #tpu.memory_space<vmem>>, vector<4x8xf32>
    %c0_11 = arith.constant 0 : index
    %c0_12 = arith.constant 0 : index
    %11 = vector.load %arg5[%c0_11, %c0_12] : memref<8x32xf32, #tpu.memory_space<vmem>>, vector<8x32xf32>
    %cst_13 = arith.constant dense<0.000000e+00> : vector<4x32xf32>
    %12 = tpu.matmul %10, %11, %cst_13 {dimension_numbers = #tpu.dot_dimension_numbers<[1], [0], [0], [1], [0, 0, 1, 1], [], []>} : vector<4x8xf32>, vector<8x32xf32>, vector<4x32xf32> -> vector<4x32xf32>
    %13 = arith.addf %9, %12 : vector<4x32xf32>
    %cst_14 = arith.constant 0.000000e+00 : f32
    %14 = vector.broadcast %cst_14 : f32 to vector<4x32xf32>
    %15 = arith.maximumf %13, %14 : vector<4x32xf32>
    %c0_15 = arith.constant 0 : index
    %c0_16 = arith.constant 0 : index
    %16 = vector.load %arg8[%c0_15, %c0_16] : memref<4x32xf32, #tpu.memory_space<vmem>>, vector<4x32xf32>
    tpu.vector_store %arg8[%c0_15, %c0_16], %15 {strides = array<i32>} : memref<4x32xf32, #tpu.memory_space<vmem>>, vector<4x32xf32>,
    %c0_17 = arith.constant 0 : index
    %c0_18 = arith.constant 0 : index
    %c0_19 = arith.constant 0 : index
    %17 = vector.load %arg6[%c0_17, %c0_18, %c0_19] : memref<4x64x32xf32, #tpu.memory_space<vmem>>, vector<1x64x32xf32>
    %18 = vector.shape_cast %17 : vector<1x64x32xf32> to vector<64x32xf32>
    %19 = vector.extract_strided_slice %18 {offsets = [0, 0], sizes = [32, 32], strides = [1, 1]} : vector<64x32xf32> to vector<32x32xf32>
    %cst_20 = arith.constant dense<0.000000e+00> : vector<4x32xf32>
    %20 = tpu.matmul %15, %19, %cst_20 {dimension_numbers = #tpu.dot_dimension_numbers<[1], [0], [0], [1], [0, 0, 1, 1], [], []>} : vector<4x32xf32>, vector<32x32xf32>, vector<4x32xf32> -> vector<4x32xf32>
    %c0_21 = arith.constant 0 : index
    %c0_22 = arith.constant 0 : index
    %21 = vector.load %arg7[%c0_21, %c0_22] : memref<4x32xf32, #tpu.memory_space<vmem>>, vector<1x32xf32>
    %22 = vector.broadcast %21 : vector<1x32xf32> to vector<4x32xf32>
    %23 = arith.addf %20, %22 : vector<4x32xf32>
    %c0_23 = arith.constant 0 : index
    %c0_24 = arith.constant 0 : index
    %24 = vector.load %arg10[%c0_23, %c0_24] : memref<4x32xf32, #tpu.memory_space<vmem>>, vector<4x32xf32>
    tpu.vector_store %arg10[%c0_23, %c0_24], %23 {strides = array<i32>} : memref<4x32xf32, #tpu.memory_space<vmem>>, vector<4x32xf32>,
    %25 = vector.extract_strided_slice %18 {offsets = [32, 0], sizes = [32, 32], strides = [1, 1]} : vector<64x32xf32> to vector<32x32xf32>
    %c1 = arith.constant 1 : index
    %c0_25 = arith.constant 0 : index
    %c0_26 = arith.constant 0 : index
    %26 = vector.load %arg6[%c1, %c0_25, %c0_26] : memref<4x64x32xf32, #tpu.memory_space<vmem>>, vector<1x64x32xf32>
    %27 = vector.shape_cast %26 : vector<1x64x32xf32> to vector<64x32xf32>
    %28 = vector.extract_strided_slice %27 {offsets = [0, 0], sizes = [32, 32], strides = [1, 1]} : vector<64x32xf32> to vector<32x32xf32>
    %cst_27 = arith.constant dense<0.000000e+00> : vector<4x32xf32>
    %29 = tpu.matmul %15, %28, %cst_27 {dimension_numbers = #tpu.dot_dimension_numbers<[1], [0], [0], [1], [0, 0, 1, 1], [], []>} : vector<4x32xf32>, vector<32x32xf32>, vector<4x32xf32> -> vector<4x32xf32>
    %c1_28 = arith.constant 1 : index
    %c0_29 = arith.constant 0 : index
    %30 = vector.load %arg7[%c1_28, %c0_29] : memref<4x32xf32, #tpu.memory_space<vmem>>, vector<1x32xf32>
    %31 = vector.broadcast %30 : vector<1x32xf32> to vector<4x32xf32>
    %32 = arith.addf %29, %31 : vector<4x32xf32>
    %c0_30 = arith.constant 0 : index
    %c0_31 = arith.constant 0 : index
    %33 = vector.load %arg11[%c0_30, %c0_31] : memref<4x32xf32, #tpu.memory_space<vmem>>, vector<4x32xf32>
    tpu.vector_store %arg11[%c0_30, %c0_31], %32 {strides = array<i32>} : memref<4x32xf32, #tpu.memory_space<vmem>>, vector<4x32xf32>,
    %34 = vector.extract_strided_slice %27 {offsets = [32, 0], sizes = [32, 32], strides = [1, 1]} : vector<64x32xf32> to vector<32x32xf32>
    %c2 = arith.constant 2 : index
    %c0_32 = arith.constant 0 : index
    %c0_33 = arith.constant 0 : index
    %35 = vector.load %arg6[%c2, %c0_32, %c0_33] : memref<4x64x32xf32, #tpu.memory_space<vmem>>, vector<1x64x32xf32>
    %36 = vector.shape_cast %35 : vector<1x64x32xf32> to vector<64x32xf32>
    %37 = vector.extract_strided_slice %36 {offsets = [0, 0], sizes = [32, 32], strides = [1, 1]} : vector<64x32xf32> to vector<32x32xf32>
    %cst_34 = arith.constant dense<0.000000e+00> : vector<4x32xf32>
    %38 = tpu.matmul %15, %37, %cst_34 {dimension_numbers = #tpu.dot_dimension_numbers<[1], [0], [0], [1], [0, 0, 1, 1], [], []>} : vector<4x32xf32>, vector<32x32xf32>, vector<4x32xf32> -> vector<4x32xf32>
    %c2_35 = arith.constant 2 : index
    %c0_36 = arith.constant 0 : index
    %39 = vector.load %arg7[%c2_35, %c0_36] : memref<4x32xf32, #tpu.memory_space<vmem>>, vector<1x32xf32>
    %40 = vector.broadcast %39 : vector<1x32xf32> to vector<4x32xf32>
    %41 = arith.addf %38, %40 : vector<4x32xf32>
    %c0_37 = arith.constant 0 : index
    %c0_38 = arith.constant 0 : index
    %42 = vector.load %arg12[%c0_37, %c0_38] : memref<4x32xf32, #tpu.memory_space<vmem>>, vector<4x32xf32>
    tpu.vector_store %arg12[%c0_37, %c0_38], %41 {strides = array<i32>} : memref<4x32xf32, #tpu.memory_space<vmem>>, vector<4x32xf32>,
    %43 = vector.extract_strided_slice %36 {offsets = [32, 0], sizes = [32, 32], strides = [1, 1]} : vector<64x32xf32> to vector<32x32xf32>
    %c3 = arith.constant 3 : index
    %c0_39 = arith.constant 0 : index
    %c0_40 = arith.constant 0 : index
    %44 = vector.load %arg6[%c3, %c0_39, %c0_40] : memref<4x64x32xf32, #tpu.memory_space<vmem>>, vector<1x64x32xf32>
    %45 = vector.shape_cast %44 : vector<1x64x32xf32> to vector<64x32xf32>
    %46 = vector.extract_strided_slice %45 {offsets = [0, 0], sizes = [32, 32], strides = [1, 1]} : vector<64x32xf32> to vector<32x32xf32>
    %cst_41 = arith.constant dense<0.000000e+00> : vector<4x32xf32>
    %47 = tpu.matmul %15, %46, %cst_41 {dimension_numbers = #tpu.dot_dimension_numbers<[1], [0], [0], [1], [0, 0, 1, 1], [], []>} : vector<4x32xf32>, vector<32x32xf32>, vector<4x32xf32> -> vector<4x32xf32>
    %c3_42 = arith.constant 3 : index
    %c0_43 = arith.constant 0 : index
    %48 = vector.load %arg7[%c3_42, %c0_43] : memref<4x32xf32, #tpu.memory_space<vmem>>, vector<1x32xf32>
    %49 = vector.broadcast %48 : vector<1x32xf32> to vector<4x32xf32>
    %50 = arith.addf %47, %49 : vector<4x32xf32>
    %c0_44 = arith.constant 0 : index
    %c0_45 = arith.constant 0 : index
    %51 = vector.load %arg13[%c0_44, %c0_45] : memref<4x32xf32, #tpu.memory_space<vmem>>, vector<4x32xf32>
    tpu.vector_store %arg13[%c0_44, %c0_45], %50 {strides = array<i32>} : memref<4x32xf32, #tpu.memory_space<vmem>>, vector<4x32xf32>,
    %52 = vector.extract_strided_slice %45 {offsets = [32, 0], sizes = [32, 32], strides = [1, 1]} : vector<64x32xf32> to vector<32x32xf32>
    %cst_46 = arith.constant 0.000000e+00 : f32
    %53 = vector.broadcast %cst_46 : f32 to vector<1x32xf32>
    %cst_47 = arith.constant 0.000000e+00 : f32
    %54 = vector.broadcast %cst_47 : f32 to vector<1x32xf32>
    %c0_i32 = arith.constant 0 : i32
    %55 = arith.index_cast %c0_i32 : i32 to index
    %c0_48 = arith.constant 0 : index
    %56 = vector.load %arg10[%55, %c0_48] : memref<4x32xf32, #tpu.memory_space<vmem>>, vector<1x32xf32>
    %cst_49 = arith.constant dense<0.000000e+00> : vector<1x32xf32>
    %57 = tpu.matmul %53, %25, %cst_49 {dimension_numbers = #tpu.dot_dimension_numbers<[1], [0], [0], [1], [0, 0, 1, 1], [], []>} : vector<1x32xf32>, vector<32x32xf32>, vector<1x32xf32> -> vector<1x32xf32>
    %58 = arith.addf %56, %57 : vector<1x32xf32>
    %59 = arith.index_cast %c0_i32 : i32 to index
    %c0_50 = arith.constant 0 : index
    %60 = vector.load %arg11[%59, %c0_50] : memref<4x32xf32, #tpu.memory_space<vmem>>, vector<1x32xf32>
    %cst_51 = arith.constant dense<0.000000e+00> : vector<1x32xf32>
    %61 = tpu.matmul %53, %34, %cst_51 {dimension_numbers = #tpu.dot_dimension_numbers<[1], [0], [0], [1], [0, 0, 1, 1], [], []>} : vector<1x32xf32>, vector<32x32xf32>, vector<1x32xf32> -> vector<1x32xf32>
    %62 = arith.addf %60, %61 : vector<1x32xf32>
    %63 = arith.index_cast %c0_i32 : i32 to index
    %c0_52 = arith.constant 0 : index
    %64 = vector.load %arg12[%63, %c0_52] : memref<4x32xf32, #tpu.memory_space<vmem>>, vector<1x32xf32>
    %cst_53 = arith.constant dense<0.000000e+00> : vector<1x32xf32>
    %65 = tpu.matmul %53, %43, %cst_53 {dimension_numbers = #tpu.dot_dimension_numbers<[1], [0], [0], [1], [0, 0, 1, 1], [], []>} : vector<1x32xf32>, vector<32x32xf32>, vector<1x32xf32> -> vector<1x32xf32>
    %66 = arith.addf %64, %65 : vector<1x32xf32>
    %67 = arith.index_cast %c0_i32 : i32 to index
    %c0_54 = arith.constant 0 : index
    %68 = vector.load %arg13[%67, %c0_54] : memref<4x32xf32, #tpu.memory_space<vmem>>, vector<1x32xf32>
    %cst_55 = arith.constant dense<0.000000e+00> : vector<1x32xf32>
    %69 = tpu.matmul %53, %52, %cst_55 {dimension_numbers = #tpu.dot_dimension_numbers<[1], [0], [0], [1], [0, 0, 1, 1], [], []>} : vector<1x32xf32>, vector<32x32xf32>, vector<1x32xf32> -> vector<1x32xf32>
    %70 = arith.addf %68, %69 : vector<1x32xf32>
    %71 = arith.negf %58 : vector<1x32xf32>
    %72 = math.exp %71 : vector<1x32xf32>
    %cst_56 = arith.constant 1.000000e+00 : f32
    %73 = vector.broadcast %cst_56 : f32 to vector<1x32xf32>
    %74 = arith.addf %73, %72 : vector<1x32xf32>
    %75 = arith.divf %73, %74 : vector<1x32xf32>
    %76 = arith.negf %62 : vector<1x32xf32>
    %77 = math.exp %76 : vector<1x32xf32>
    %cst_57 = arith.constant 1.000000e+00 : f32
    %78 = vector.broadcast %cst_57 : f32 to vector<1x32xf32>
    %79 = arith.addf %78, %77 : vector<1x32xf32>
    %80 = arith.divf %78, %79 : vector<1x32xf32>
    %81 = math.tanh %66 : vector<1x32xf32>
    %82 = arith.negf %70 : vector<1x32xf32>
    %83 = math.exp %82 : vector<1x32xf32>
    %cst_58 = arith.constant 1.000000e+00 : f32
    %84 = vector.broadcast %cst_58 : f32 to vector<1x32xf32>
    %85 = arith.addf %84, %83 : vector<1x32xf32>
    %86 = arith.divf %84, %85 : vector<1x32xf32>
    %87 = arith.mulf %80, %54 : vector<1x32xf32>
    %88 = arith.mulf %75, %81 : vector<1x32xf32>
    %89 = arith.addf %87, %88 : vector<1x32xf32>
    %90 = math.tanh %89 : vector<1x32xf32>
    %91 = arith.mulf %86, %90 : vector<1x32xf32>
    %92 = arith.index_cast %c0_i32 : i32 to index
    %c0_59 = arith.constant 0 : index
    %93 = vector.load %arg9[%92, %c0_59] : memref<4x32xf32, #tpu.memory_space<vmem>>, vector<1x32xf32>
    tpu.vector_store %arg9[%92, %c0_59], %91 {strides = array<i32>} : memref<4x32xf32, #tpu.memory_space<vmem>>, vector<1x32xf32>,
    %c1_i32 = arith.constant 1 : i32
    %94 = arith.index_cast %c1_i32 : i32 to index
    %c0_60 = arith.constant 0 : index
    %95 = vector.load %arg10[%94, %c0_60] : memref<4x32xf32, #tpu.memory_space<vmem>>, vector<1x32xf32>
    %cst_61 = arith.constant dense<0.000000e+00> : vector<1x32xf32>
    %96 = tpu.matmul %91, %25, %cst_61 {dimension_numbers = #tpu.dot_dimension_numbers<[1], [0], [0], [1], [0, 0, 1, 1], [], []>} : vector<1x32xf32>, vector<32x32xf32>, vector<1x32xf32> -> vector<1x32xf32>
    %97 = arith.addf %95, %96 : vector<1x32xf32>
    %98 = arith.index_cast %c1_i32 : i32 to index
    %c0_62 = arith.constant 0 : index
    %99 = vector.load %arg11[%98, %c0_62] : memref<4x32xf32, #tpu.memory_space<vmem>>, vector<1x32xf32>
    %cst_63 = arith.constant dense<0.000000e+00> : vector<1x32xf32>
    %100 = tpu.matmul %91, %34, %cst_63 {dimension_numbers = #tpu.dot_dimension_numbers<[1], [0], [0], [1], [0, 0, 1, 1], [], []>} : vector<1x32xf32>, vector<32x32xf32>, vector<1x32xf32> -> vector<1x32xf32>
    %101 = arith.addf %99, %100 : vector<1x32xf32>
    %102 = arith.index_cast %c1_i32 : i32 to index
    %c0_64 = arith.constant 0 : index
    %103 = vector.load %arg12[%102, %c0_64] : memref<4x32xf32, #tpu.memory_space<vmem>>, vector<1x32xf32>
    %cst_65 = arith.constant dense<0.000000e+00> : vector<1x32xf32>
    %104 = tpu.matmul %91, %43, %cst_65 {dimension_numbers = #tpu.dot_dimension_numbers<[1], [0], [0], [1], [0, 0, 1, 1], [], []>} : vector<1x32xf32>, vector<32x32xf32>, vector<1x32xf32> -> vector<1x32xf32>
    %105 = arith.addf %103, %104 : vector<1x32xf32>
    %106 = arith.index_cast %c1_i32 : i32 to index
    %c0_66 = arith.constant 0 : index
    %107 = vector.load %arg13[%106, %c0_66] : memref<4x32xf32, #tpu.memory_space<vmem>>, vector<1x32xf32>
    %cst_67 = arith.constant dense<0.000000e+00> : vector<1x32xf32>
    %108 = tpu.matmul %91, %52, %cst_67 {dimension_numbers = #tpu.dot_dimension_numbers<[1], [0], [0], [1], [0, 0, 1, 1], [], []>} : vector<1x32xf32>, vector<32x32xf32>, vector<1x32xf32> -> vector<1x32xf32>
    %109 = arith.addf %107, %108 : vector<1x32xf32>
    %110 = arith.negf %97 : vector<1x32xf32>
    %111 = math.exp %110 : vector<1x32xf32>
    %cst_68 = arith.constant 1.000000e+00 : f32
    %112 = vector.broadcast %cst_68 : f32 to vector<1x32xf32>
    %113 = arith.addf %112, %111 : vector<1x32xf32>
    %114 = arith.divf %112, %113 : vector<1x32xf32>
    %115 = arith.negf %101 : vector<1x32xf32>
    %116 = math.exp %115 : vector<1x32xf32>
    %cst_69 = arith.constant 1.000000e+00 : f32
    %117 = vector.broadcast %cst_69 : f32 to vector<1x32xf32>
    %118 = arith.addf %117, %116 : vector<1x32xf32>
    %119 = arith.divf %117, %118 : vector<1x32xf32>
    %120 = math.tanh %105 : vector<1x32xf32>
    %121 = arith.negf %109 : vector<1x32xf32>
    %122 = math.exp %121 : vector<1x32xf32>
    %cst_70 = arith.constant 1.000000e+00 : f32
    %123 = vector.broadcast %cst_70 : f32 to vector<1x32xf32>
    %124 = arith.addf %123, %122 : vector<1x32xf32>
    %125 = arith.divf %123, %124 : vector<1x32xf32>
    %126 = arith.mulf %119, %89 : vector<1x32xf32>
    %127 = arith.mulf %114, %120 : vector<1x32xf32>
    %128 = arith.addf %126, %127 : vector<1x32xf32>
    %129 = math.tanh %128 : vector<1x32xf32>
    %130 = arith.mulf %125, %129 : vector<1x32xf32>
    %131 = arith.index_cast %c1_i32 : i32 to index
    %c0_71 = arith.constant 0 : index
    %132 = vector.load %arg9[%131, %c0_71] : memref<4x32xf32, #tpu.memory_space<vmem>>, vector<1x32xf32>
    tpu.vector_store %arg9[%131, %c0_71], %130 {strides = array<i32>} : memref<4x32xf32, #tpu.memory_space<vmem>>, vector<1x32xf32>,
    %c2_i32 = arith.constant 2 : i32
    %133 = arith.index_cast %c2_i32 : i32 to index
    %c0_72 = arith.constant 0 : index
    %134 = vector.load %arg10[%133, %c0_72] : memref<4x32xf32, #tpu.memory_space<vmem>>, vector<1x32xf32>
    %cst_73 = arith.constant dense<0.000000e+00> : vector<1x32xf32>
    %135 = tpu.matmul %130, %25, %cst_73 {dimension_numbers = #tpu.dot_dimension_numbers<[1], [0], [0], [1], [0, 0, 1, 1], [], []>} : vector<1x32xf32>, vector<32x32xf32>, vector<1x32xf32> -> vector<1x32xf32>
    %136 = arith.addf %134, %135 : vector<1x32xf32>
    %137 = arith.index_cast %c2_i32 : i32 to index
    %c0_74 = arith.constant 0 : index
    %138 = vector.load %arg11[%137, %c0_74] : memref<4x32xf32, #tpu.memory_space<vmem>>, vector<1x32xf32>
    %cst_75 = arith.constant dense<0.000000e+00> : vector<1x32xf32>
    %139 = tpu.matmul %130, %34, %cst_75 {dimension_numbers = #tpu.dot_dimension_numbers<[1], [0], [0], [1], [0, 0, 1, 1], [], []>} : vector<1x32xf32>, vector<32x32xf32>, vector<1x32xf32> -> vector<1x32xf32>
    %140 = arith.addf %138, %139 : vector<1x32xf32>
    %141 = arith.index_cast %c2_i32 : i32 to index
    %c0_76 = arith.constant 0 : index
    %142 = vector.load %arg12[%141, %c0_76] : memref<4x32xf32, #tpu.memory_space<vmem>>, vector<1x32xf32>
    %cst_77 = arith.constant dense<0.000000e+00> : vector<1x32xf32>
    %143 = tpu.matmul %130, %43, %cst_77 {dimension_numbers = #tpu.dot_dimension_numbers<[1], [0], [0], [1], [0, 0, 1, 1], [], []>} : vector<1x32xf32>, vector<32x32xf32>, vector<1x32xf32> -> vector<1x32xf32>
    %144 = arith.addf %142, %143 : vector<1x32xf32>
    %145 = arith.index_cast %c2_i32 : i32 to index
    %c0_78 = arith.constant 0 : index
    %146 = vector.load %arg13[%145, %c0_78] : memref<4x32xf32, #tpu.memory_space<vmem>>, vector<1x32xf32>
    %cst_79 = arith.constant dense<0.000000e+00> : vector<1x32xf32>
    %147 = tpu.matmul %130, %52, %cst_79 {dimension_numbers = #tpu.dot_dimension_numbers<[1], [0], [0], [1], [0, 0, 1, 1], [], []>} : vector<1x32xf32>, vector<32x32xf32>, vector<1x32xf32> -> vector<1x32xf32>
    %148 = arith.addf %146, %147 : vector<1x32xf32>
    %149 = arith.negf %136 : vector<1x32xf32>
    %150 = math.exp %149 : vector<1x32xf32>
    %cst_80 = arith.constant 1.000000e+00 : f32
    %151 = vector.broadcast %cst_80 : f32 to vector<1x32xf32>
    %152 = arith.addf %151, %150 : vector<1x32xf32>
    %153 = arith.divf %151, %152 : vector<1x32xf32>
    %154 = arith.negf %140 : vector<1x32xf32>
    %155 = math.exp %154 : vector<1x32xf32>
    %cst_81 = arith.constant 1.000000e+00 : f32
    %156 = vector.broadcast %cst_81 : f32 to vector<1x32xf32>
    %157 = arith.addf %156, %155 : vector<1x32xf32>
    %158 = arith.divf %156, %157 : vector<1x32xf32>
    %159 = math.tanh %144 : vector<1x32xf32>
    %160 = arith.negf %148 : vector<1x32xf32>
    %161 = math.exp %160 : vector<1x32xf32>
    %cst_82 = arith.constant 1.000000e+00 : f32
    %162 = vector.broadcast %cst_82 : f32 to vector<1x32xf32>
    %163 = arith.addf %162, %161 : vector<1x32xf32>
    %164 = arith.divf %162, %163 : vector<1x32xf32>
    %165 = arith.mulf %158, %128 : vector<1x32xf32>
    %166 = arith.mulf %153, %159 : vector<1x32xf32>
    %167 = arith.addf %165, %166 : vector<1x32xf32>
    %168 = math.tanh %167 : vector<1x32xf32>
    %169 = arith.mulf %164, %168 : vector<1x32xf32>
    %170 = arith.index_cast %c2_i32 : i32 to index
    %c0_83 = arith.constant 0 : index
    %171 = vector.load %arg9[%170, %c0_83] : memref<4x32xf32, #tpu.memory_space<vmem>>, vector<1x32xf32>
    tpu.vector_store %arg9[%170, %c0_83], %169 {strides = array<i32>} : memref<4x32xf32, #tpu.memory_space<vmem>>, vector<1x32xf32>,
    %c3_i32 = arith.constant 3 : i32
    %172 = arith.index_cast %c3_i32 : i32 to index
    %c0_84 = arith.constant 0 : index
    %173 = vector.load %arg10[%172, %c0_84] : memref<4x32xf32, #tpu.memory_space<vmem>>, vector<1x32xf32>
    %cst_85 = arith.constant dense<0.000000e+00> : vector<1x32xf32>
    %174 = tpu.matmul %169, %25, %cst_85 {dimension_numbers = #tpu.dot_dimension_numbers<[1], [0], [0], [1], [0, 0, 1, 1], [], []>} : vector<1x32xf32>, vector<32x32xf32>, vector<1x32xf32> -> vector<1x32xf32>
    %175 = arith.addf %173, %174 : vector<1x32xf32>
    %176 = arith.index_cast %c3_i32 : i32 to index
    %c0_86 = arith.constant 0 : index
    %177 = vector.load %arg11[%176, %c0_86] : memref<4x32xf32, #tpu.memory_space<vmem>>, vector<1x32xf32>
    %cst_87 = arith.constant dense<0.000000e+00> : vector<1x32xf32>
    %178 = tpu.matmul %169, %34, %cst_87 {dimension_numbers = #tpu.dot_dimension_numbers<[1], [0], [0], [1], [0, 0, 1, 1], [], []>} : vector<1x32xf32>, vector<32x32xf32>, vector<1x32xf32> -> vector<1x32xf32>
    %179 = arith.addf %177, %178 : vector<1x32xf32>
    %180 = arith.index_cast %c3_i32 : i32 to index
    %c0_88 = arith.constant 0 : index
    %181 = vector.load %arg12[%180, %c0_88] : memref<4x32xf32, #tpu.memory_space<vmem>>, vector<1x32xf32>
    %cst_89 = arith.constant dense<0.000000e+00> : vector<1x32xf32>
    %182 = tpu.matmul %169, %43, %cst_89 {dimension_numbers = #tpu.dot_dimension_numbers<[1], [0], [0], [1], [0, 0, 1, 1], [], []>} : vector<1x32xf32>, vector<32x32xf32>, vector<1x32xf32> -> vector<1x32xf32>
    %183 = arith.addf %181, %182 : vector<1x32xf32>
    %184 = arith.index_cast %c3_i32 : i32 to index
    %c0_90 = arith.constant 0 : index
    %185 = vector.load %arg13[%184, %c0_90] : memref<4x32xf32, #tpu.memory_space<vmem>>, vector<1x32xf32>
    %cst_91 = arith.constant dense<0.000000e+00> : vector<1x32xf32>
    %186 = tpu.matmul %169, %52, %cst_91 {dimension_numbers = #tpu.dot_dimension_numbers<[1], [0], [0], [1], [0, 0, 1, 1], [], []>} : vector<1x32xf32>, vector<32x32xf32>, vector<1x32xf32> -> vector<1x32xf32>
    %187 = arith.addf %185, %186 : vector<1x32xf32>
    %188 = arith.negf %175 : vector<1x32xf32>
    %189 = math.exp %188 : vector<1x32xf32>
    %cst_92 = arith.constant 1.000000e+00 : f32
    %190 = vector.broadcast %cst_92 : f32 to vector<1x32xf32>
    %191 = arith.addf %190, %189 : vector<1x32xf32>
    %192 = arith.divf %190, %191 : vector<1x32xf32>
    %193 = arith.negf %179 : vector<1x32xf32>
    %194 = math.exp %193 : vector<1x32xf32>
    %cst_93 = arith.constant 1.000000e+00 : f32
    %195 = vector.broadcast %cst_93 : f32 to vector<1x32xf32>
    %196 = arith.addf %195, %194 : vector<1x32xf32>
    %197 = arith.divf %195, %196 : vector<1x32xf32>
    %198 = math.tanh %183 : vector<1x32xf32>
    %199 = arith.negf %187 : vector<1x32xf32>
    %200 = math.exp %199 : vector<1x32xf32>
    %cst_94 = arith.constant 1.000000e+00 : f32
    %201 = vector.broadcast %cst_94 : f32 to vector<1x32xf32>
    %202 = arith.addf %201, %200 : vector<1x32xf32>
    %203 = arith.divf %201, %202 : vector<1x32xf32>
    %204 = arith.mulf %197, %167 : vector<1x32xf32>
    %205 = arith.mulf %192, %198 : vector<1x32xf32>
    %206 = arith.addf %204, %205 : vector<1x32xf32>
    %207 = math.tanh %206 : vector<1x32xf32>
    %208 = arith.mulf %203, %207 : vector<1x32xf32>
    %209 = arith.index_cast %c3_i32 : i32 to index
    %c0_95 = arith.constant 0 : index
    %210 = vector.load %arg9[%209, %c0_95] : memref<4x32xf32, #tpu.memory_space<vmem>>, vector<1x32xf32>
    tpu.vector_store %arg9[%209, %c0_95], %208 {strides = array<i32>} : memref<4x32xf32, #tpu.memory_space<vmem>>, vector<1x32xf32>,
    %c4_i32 = arith.constant 4 : i32
    return
  }
}

</mosaic_0001>

<llo_original>
// kernel: tpu_custom_call.1
$region0: #{tpu_custom_call.1}
  #allocation0 [shape = 'u32[]', space=smem, size = 0x4, offset = 0x4, fixed_abs, tag = 'smem constant byte address 0x4 - core index']
  #allocation1 [shape = 'u32[144,128]{1,0:T(1,128)}', space=vmem, size = 0x12000, scoped, tag = 'internal scratch']
  #allocation2 [shape = 'f32[4,32]{1,0:T(4,128)}', space=vmem, size = 0x800, scoped, tag = 'scratch operand']
  #allocation3 [shape = 'f32[4,32]{1,0:T(4,128)}', space=vmem, size = 0x800, scoped, tag = 'scratch operand']
  #allocation4 [shape = 'f32[4,32]{1,0:T(4,128)}', space=vmem, size = 0x800, scoped, tag = 'scratch operand']
  #allocation5 [shape = 'f32[4,32]{1,0:T(4,128)}', space=vmem, size = 0x800, scoped, tag = 'scratch operand']
  %s0 = inlined_call_operand.vmem [shape: f32[4,16], index: 0, kind: input, shape index: {}]
  %s1 = inlined_call_operand.vmem [shape: f32[4,8], index: 1, kind: input, shape index: {}]
  %s2 = inlined_call_operand.vmem [shape: f32[16,16], index: 2, kind: input, shape index: {}]
  %s3 = inlined_call_operand.vmem [shape: f32[1,16], index: 3, kind: input, shape index: {}]
  %s4 = inlined_call_operand.vmem [shape: f32[16,32], index: 4, kind: input, shape index: {}]
  %s5 = inlined_call_operand.vmem [shape: f32[8,32], index: 5, kind: input, shape index: {}]
  %s6 = inlined_call_operand.vmem [shape: f32[4,64,32], index: 6, kind: input, shape index: {}]
  %s7 = inlined_call_operand.vmem [shape: f32[4,32], index: 7, kind: input, shape index: {}]
  %s8 = inlined_call_operand.hbm [shape: f32[4,32], index: 8, kind: output, shape index: {0}]
  %s9 = inlined_call_operand.hbm [shape: f32[4,32], index: 9, kind: output, shape index: {1}]
  %10 = xla_tuple %s8, %s9
  %s11 = sld [smem:[#allocation0]]
  $region50: #{tpu_custom_call.1} parent=0
    _
  %s13 = ssub.s32 1, %s11
  %s14 = scalar_select 0, %s13, %s11
  $region1: #{tpu_custom_call.1} parent=0
    #allocation6 [shape = 'u8[2048]{0}', space=vmem, size = 0x800, scoped, tag = 'output window, operand 0, single buffered']
    #allocation7 [shape = 's32[1]{0}', space=sflag, size = 0x4, scoped, tag = 'scoped memory for tpu_custom_call.1']
    #allocation8 [shape = 'u8[2048]{0}', space=vmem, size = 0x800, scoped, tag = 'output window, operand 1, single buffered']
    #allocation9 [shape = 's32[1]{0}', space=sflag, size = 0x4, scoped, tag = 'scoped memory for tpu_custom_call.1']
    %15 = vsyncpa [#allocation7], 0
    %16 = vsyncpa [#allocation9], 0
    // Predicated region
    $region2: #{tpu_custom_call.1} parent=1 // pred_check
      _
    $region3: #{tpu_custom_call.1} parent=1 // pred_check_branch
      %18 = sbr.rel (0) target = $region5
    $region4: #{tpu_custom_call.1} parent=1 // pred_region
      _
    $region5: #{tpu_custom_call.1} parent=1 // pred_fallthru
      _
    // Predicated region
    $region6: #{tpu_custom_call.1} parent=1 // pred_check
      _
    $region7: #{tpu_custom_call.1} parent=1 // pred_check_branch
      %20 = sbr.rel (0) target = $region9
    $region8: #{tpu_custom_call.1} parent=1 // pred_region
      _
    $region9: #{tpu_custom_call.1} parent=1 // pred_fallthru
      _
    // Predicated region
    $region10: #{tpu_custom_call.1} parent=1 // pred_check
      _
    $region11: #{tpu_custom_call.1} parent=1 // pred_check_branch
      %22 = sbr.rel (0) target = $region13
    $region12: #{tpu_custom_call.1} parent=1 // pred_region
      _
    $region13: #{tpu_custom_call.1} parent=1 // pred_fallthru
      _
    // Predicated region
    $region14: #{tpu_custom_call.1} parent=1 // pred_check
      _
    $region15: #{tpu_custom_call.1} parent=1 // pred_check_branch
      %24 = sbr.rel (0) target = $region17
    $region16: #{tpu_custom_call.1} parent=1 // pred_region
      _
    $region17: #{tpu_custom_call.1} parent=1 // pred_fallthru
      _
    // Predicated region
    $region18: #{tpu_custom_call.1} parent=1 // pred_check
      _
    $region19: #{tpu_custom_call.1} parent=1 // pred_check_branch
      %26 = sbr.rel (0) target = $region21
    $region20: #{tpu_custom_call.1} parent=1 // pred_region
      _
    $region21: #{tpu_custom_call.1} parent=1 // pred_fallthru
      _
    // Predicated region
    $region22: #{tpu_custom_call.1} parent=1 // pred_check
      _
    $region23: #{tpu_custom_call.1} parent=1 // pred_check_branch
      %28 = sbr.rel (0) target = $region25
    $region24: #{tpu_custom_call.1} parent=1 // pred_region
      _
    $region25: #{tpu_custom_call.1} parent=1 // pred_fallthru
      _
    // Predicated region
    $region26: #{tpu_custom_call.1} parent=1 // pred_check
      _
    $region27: #{tpu_custom_call.1} parent=1 // pred_check_branch
      %30 = sbr.rel (0) target = $region29
    $region28: #{tpu_custom_call.1} parent=1 // pred_region
      _
    $region29: #{tpu_custom_call.1} parent=1 // pred_fallthru
      _
    // Predicated region
    $region30: #{tpu_custom_call.1} parent=1 // pred_check
      _
    $region31: #{tpu_custom_call.1} parent=1 // pred_check_branch
      %32 = sbr.rel (0) target = $region33
    $region32: #{tpu_custom_call.1} parent=1 // pred_region
      _
    $region33: #{tpu_custom_call.1} parent=1 // pred_fallthru
      _
    %v33 = vld [vmem:[%s0] sm:$0xf]
    %v34 = vld [vmem:[%s2] sm:$0xff]
    %v35 = vld [vmem:[%s2 + $0x8] sm:$0xff]
    %v36 = vld [vmem:[%s3] sm:$0x1]
    %v38 = vlaneseq
    %v39 = vshrl.u32 %v38, 7
    %v40 = vsub.s32 0, %v39
    %v41 = vrot.slane %v36, %v40
    %vm43 = vcmask 130048
    %v45 = vsel %vm43, %v33, 0
    %47 = vmatprep.subr.mxu0 0.0
    %48 = vmatpush1.msra.mxu0 0.0
    %49 = vmatprep.subr.mxu0 0.0
    %50 = vmatpush1.msra.mxu0 0.0
    %51 = vmatprep.subr.mxu0 0.0
    %52 = vmatpush1.msra.mxu0 0.0
    %53 = vmatprep.subr.mxu0 0.0
    %54 = vmatpush1.msra.mxu0 0.0
    %55 = vmatprep.subr.mxu0 0.0
    %56 = vmatpush1.msra.mxu0 0.0
    %57 = vmatprep.subr.mxu0 0.0
    %58 = vmatpush1.msra.mxu0 0.0
    %59 = vmatprep.subr.mxu0 0.0
    %60 = vmatpush1.msra.mxu0 0.0
    %61 = vmatprep.subr.mxu0 0.0
    %62 = vmatpush1.msra.mxu0 0.0
    %63 = vmatprep.subr.mxu0 0.0
    %64 = vmatpush1.msra.mxu0 0.0
    %65 = vmatprep.subr.mxu0 0.0
    %66 = vmatpush1.msra.mxu0 0.0
    %67 = vmatprep.subr.mxu0 0.0
    %68 = vmatpush1.msra.mxu0 0.0
    %69 = vmatprep.subr.mxu0 0.0
    %70 = vmatpush1.msra.mxu0 0.0
    %71 = vmatprep.subr.mxu0 0.0
    %72 = vmatpush1.msra.mxu0 0.0
    %73 = vmatprep.subr.mxu0 0.0
    %74 = vmatpush1.msra.mxu0 0.0
    %75 = vmatprep.subr.mxu0 0.0
    %76 = vmatpush1.msra.mxu0 %v35
    %77 = vmatprep.subr.mxu0 0.0
    %78 = vmatpush1.msra.mxu0 %v34
    %79 = vmatprep.subr.mxu0 0.0
    %80 = vmatpush2.msra.mxu0 0.0
    %81 = vmatprep.subr.mxu0 0.0
    %82 = vmatpush2.msra.mxu0 0.0
    %83 = vmatprep.subr.mxu0 0.0
    %84 = vmatpush2.msra.mxu0 0.0
    %85 = vmatprep.subr.mxu0 0.0
    %86 = vmatpush2.msra.mxu0 0.0
    %87 = vmatprep.subr.mxu0 0.0
    %88 = vmatpush2.msra.mxu0 0.0
    %89 = vmatprep.subr.mxu0 0.0
    %90 = vmatpush2.msra.mxu0 0.0
    %91 = vmatprep.subr.mxu0 0.0
    %92 = vmatpush2.msra.mxu0 0.0
    %93 = vmatprep.subr.mxu0 0.0
    %94 = vmatpush2.msra.mxu0 0.0
    %95 = vmatprep.subr.mxu0 0.0
    %96 = vmatpush2.msra.mxu0 0.0
    %97 = vmatprep.subr.mxu0 0.0
    %98 = vmatpush2.msra.mxu0 0.0
    %99 = vmatprep.subr.mxu0 0.0
    %100 = vmatpush2.msra.mxu0 0.0
    %101 = vmatprep.subr.mxu0 0.0
    %102 = vmatpush2.msra.mxu0 0.0
    %103 = vmatprep.subr.mxu0 0.0
    %104 = vmatpush2.msra.mxu0 0.0
    %105 = vmatprep.subr.mxu0 0.0
    %106 = vmatpush2.msra.mxu0 0.0
    %107 = vmatprep.subr.mxu0 0.0
    %108 = vmatpush2.msra.mxu0 0.0
    %109 = vmatprep.subr.mxu0 0.0
    %110 = vmatpush2.msra.mxu0 0.0
    %111 = vmatprep.mubr.f32.mxu0 0.0
    %112 = vmatmul.mubr.f32.gmra.mxu0 %v45
    %v113 = vpop.f32.mrf.mxu0
    %v114 = vadd.f32 %v41, %v113
    %v115 = vpop.f32.mrf.mxu0
    %116 = vdwg.mxu0
    %v117 = vmax.f32 %v114, 0.0
    %v118 = vld [vmem:[%s4] sm:$0xff]
    %v119 = vld [vmem:[%s4 + $0x8] sm:$0xff]
    %v120 = vld [vmem:[%s1] sm:$0xf]
    %v121 = vld [vmem:[%s5] sm:$0xff]
    %vm122 = vcmask 64512
    %v124 = vsel %vm122, %v120, 0
    %126 = vmatprep.subr.mxu0 0.0
    %127 = vmatpush1.msra.mxu0 0.0
    %128 = vmatprep.subr.mxu0 0.0
    %129 = vmatpush1.msra.mxu0 0.0
    %130 = vmatprep.subr.mxu0 0.0
    %131 = vmatpush1.msra.mxu0 0.0
    %132 = vmatprep.subr.mxu0 0.0
    %133 = vmatpush1.msra.mxu0 0.0
    %134 = vmatprep.subr.mxu0 0.0
    %135 = vmatpush1.msra.mxu0 0.0
    %136 = vmatprep.subr.mxu0 0.0
    %137 = vmatpush1.msra.mxu0 0.0
    %138 = vmatprep.subr.mxu0 0.0
    %139 = vmatpush1.msra.mxu0 0.0
    %140 = vmatprep.subr.mxu0 0.0
    %141 = vmatpush1.msra.mxu0 0.0
    %142 = vmatprep.subr.mxu0 0.0
    %143 = vmatpush1.msra.mxu0 0.0
    %144 = vmatprep.subr.mxu0 0.0
    %145 = vmatpush1.msra.mxu0 0.0
    %146 = vmatprep.subr.mxu0 0.0
    %147 = vmatpush1.msra.mxu0 0.0
    %148 = vmatprep.subr.mxu0 0.0
    %149 = vmatpush1.msra.mxu0 0.0
    %150 = vmatprep.subr.mxu0 0.0
    %151 = vmatpush1.msra.mxu0 0.0
    %152 = vmatprep.subr.mxu0 0.0
    %153 = vmatpush1.msra.mxu0 0.0
    %154 = vmatprep.subr.mxu0 0.0
    %155 = vmatpush1.msra.mxu0 0.0
    %156 = vmatprep.subr.mxu0 0.0
    %157 = vmatpush1.msra.mxu0 %v121
    %158 = vmatprep.subr.mxu0 0.0
    %159 = vmatpush2.msra.mxu0 0.0
    %160 = vmatprep.subr.mxu0 0.0
    %161 = vmatpush2.msra.mxu0 0.0
    %162 = vmatprep.subr.mxu0 0.0
    %163 = vmatpush2.msra.mxu0 0.0
    %164 = vmatprep.subr.mxu0 0.0
    %165 = vmatpush2.msra.mxu0 0.0
    %166 = vmatprep.subr.mxu0 0.0
    %167 = vmatpush2.msra.mxu0 0.0
    %168 = vmatprep.subr.mxu0 0.0
    %169 = vmatpush2.msra.mxu0 0.0
    %170 = vmatprep.subr.mxu0 0.0
    %171 = vmatpush2.msra.mxu0 0.0
    %172 = vmatprep.subr.mxu0 0.0
    %173 = vmatpush2.msra.mxu0 0.0
    %174 = vmatprep.subr.mxu0 0.0
    %175 = vmatpush2.msra.mxu0 0.0
    %176 = vmatprep.subr.mxu0 0.0
    %177 = vmatpush2.msra.mxu0 0.0
    %178 = vmatprep.subr.mxu0 0.0
    %179 = vmatpush2.msra.mxu0 0.0
    %180 = vmatprep.subr.mxu0 0.0
    %181 = vmatpush2.msra.mxu0 0.0
    %182 = vmatprep.subr.mxu0 0.0
    %183 = vmatpush2.msra.mxu0 0.0
    %184 = vmatprep.subr.mxu0 0.0
    %185 = vmatpush2.msra.mxu0 0.0
    %186 = vmatprep.subr.mxu0 0.0
    %187 = vmatpush2.msra.mxu0 0.0
    %188 = vmatprep.subr.mxu0 0.0
    %189 = vmatpush2.msra.mxu0 0.0
    %190 = vmatprep.mubr.f32.mxu0 0.0
    %191 = vmatmul.mubr.f32.gmra.mxu0 %v124
    %v192 = vpop.f32.mrf.mxu0
    %v193 = vadd.f32 0.0, %v192
    %v194 = vpop.f32.mrf.mxu0
    %195 = vdwg.mxu0
    %v197 = vsel %vm43, %v117, 0
    %199 = vmatprep.subr.mxu0 0.0
    %200 = vmatpush1.msra.mxu0 0.0
    %201 = vmatprep.subr.mxu0 0.0
    %202 = vmatpush1.msra.mxu0 0.0
    %203 = vmatprep.subr.mxu0 0.0
    %204 = vmatpush1.msra.mxu0 0.0
    %205 = vmatprep.subr.mxu0 0.0
    %206 = vmatpush1.msra.mxu0 0.0
    %207 = vmatprep.subr.mxu0 0.0
    %208 = vmatpush1.msra.mxu0 0.0
    %209 = vmatprep.subr.mxu0 0.0
    %210 = vmatpush1.msra.mxu0 0.0
    %211 = vmatprep.subr.mxu0 0.0
    %212 = vmatpush1.msra.mxu0 0.0
    %213 = vmatprep.subr.mxu0 0.0
    %214 = vmatpush1.msra.mxu0 0.0
    %215 = vmatprep.subr.mxu0 0.0
    %216 = vmatpush1.msra.mxu0 0.0
    %217 = vmatprep.subr.mxu0 0.0
    %218 = vmatpush1.msra.mxu0 0.0
    %219 = vmatprep.subr.mxu0 0.0
    %220 = vmatpush1.msra.mxu0 0.0
    %221 = vmatprep.subr.mxu0 0.0
    %222 = vmatpush1.msra.mxu0 0.0
    %223 = vmatprep.subr.mxu0 0.0
    %224 = vmatpush1.msra.mxu0 0.0
    %225 = vmatprep.subr.mxu0 0.0
    %226 = vmatpush1.msra.mxu0 0.0
    %227 = vmatprep.subr.mxu0 0.0
    %228 = vmatpush1.msra.mxu0 %v119
    %229 = vmatprep.subr.mxu0 0.0
    %230 = vmatpush1.msra.mxu0 %v118
    %231 = vmatprep.subr.mxu0 0.0
    %232 = vmatpush2.msra.mxu0 0.0
    %233 = vmatprep.subr.mxu0 0.0
    %234 = vmatpush2.msra.mxu0 0.0
    %235 = vmatprep.subr.mxu0 0.0
    %236 = vmatpush2.msra.mxu0 0.0
    %237 = vmatprep.subr.mxu0 0.0
    %238 = vmatpush2.msra.mxu0 0.0
    %239 = vmatprep.subr.mxu0 0.0
    %240 = vmatpush2.msra.mxu0 0.0
    %241 = vmatprep.subr.mxu0 0.0
    %242 = vmatpush2.msra.mxu0 0.0
    %243 = vmatprep.subr.mxu0 0.0
    %244 = vmatpush2.msra.mxu0 0.0
    %245 = vmatprep.subr.mxu0 0.0
    %246 = vmatpush2.msra.mxu0 0.0
    %247 = vmatprep.subr.mxu0 0.0
    %248 = vmatpush2.msra.mxu0 0.0
    %249 = vmatprep.subr.mxu0 0.0
    %250 = vmatpush2.msra.mxu0 0.0
    %251 = vmatprep.subr.mxu0 0.0
    %252 = vmatpush2.msra.mxu0 0.0
    %253 = vmatprep.subr.mxu0 0.0
    %254 = vmatpush2.msra.mxu0 0.0
    %255 = vmatprep.subr.mxu0 0.0
    %256 = vmatpush2.msra.mxu0 0.0
    %257 = vmatprep.subr.mxu0 0.0
    %258 = vmatpush2.msra.mxu0 0.0
    %259 = vmatprep.subr.mxu0 0.0
    %260 = vmatpush2.msra.mxu0 0.0
    %261 = vmatprep.subr.mxu0 0.0
    %262 = vmatpush2.msra.mxu0 0.0
    %263 = vmatprep.mubr.f32.mxu0 0.0
    %264 = vmatmul.mubr.f32.gmra.mxu0 %v197
    %v265 = vpop.f32.mrf.mxu0
    %v266 = vadd.f32 %v193, %v265
    %v267 = vpop.f32.mrf.mxu0
    %268 = vdwg.mxu0
    %v269 = vmax.f32 %v266, 0.0
    %vm270 = vcmask 257024
    %271 = vst.msk [vmem:[#allocation6] sm:$0xf] %vm270, %v269
    %v272 = vld [vmem:[%s6] sm:$0xff]
    %v273 = vld [vmem:[%s6 + $0x8] sm:$0xff]
    %v274 = vld [vmem:[%s6 + $0x10] sm:$0xff]
    %v275 = vld [vmem:[%s6 + $0x18] sm:$0xff]
    %v276 = vld [vmem:[%s6 + $0x20] sm:$0xff]
    %v277 = vld [vmem:[%s6 + $0x28] sm:$0xff]
    %v278 = vld [vmem:[%s6 + $0x30] sm:$0xff]
    %v279 = vld [vmem:[%s6 + $0x38] sm:$0xff]
    %v280 = vld [vmem:[%s7] sm:$0x1]
    %v281 = vlaneseq
    %v282 = vshrl.u32 %v281, 7
    %v283 = vsub.s32 0, %v282
    %v284 = vrot.slane %v280, %v283
    %vm285 = vcmask 261120
    %v287 = vsel %vm285, %v269, 0
    %289 = vmatprep.subr.mxu0 0.0
    %290 = vmatpush1.msra.mxu0 0.0
    %291 = vmatprep.subr.mxu0 0.0
    %292 = vmatpush1.msra.mxu0 0.0
    %293 = vmatprep.subr.mxu0 0.0
    %294 = vmatpush1.msra.mxu0 0.0
    %295 = vmatprep.subr.mxu0 0.0
    %296 = vmatpush1.msra.mxu0 0.0
    %297 = vmatprep.subr.mxu0 0.0
    %298 = vmatpush1.msra.mxu0 0.0
    %299 = vmatprep.subr.mxu0 0.0
    %300 = vmatpush1.msra.mxu0 0.0
    %301 = vmatprep.subr.mxu0 0.0
    %302 = vmatpush1.msra.mxu0 0.0
    %303 = vmatprep.subr.mxu0 0.0
    %304 = vmatpush1.msra.mxu0 0.0
    %305 = vmatprep.subr.mxu0 0.0
    %306 = vmatpush1.msra.mxu0 0.0
    %307 = vmatprep.subr.mxu0 0.0
    %308 = vmatpush1.msra.mxu0 0.0
    %309 = vmatprep.subr.mxu0 0.0
    %310 = vmatpush1.msra.mxu0 0.0
    %311 = vmatprep.subr.mxu0 0.0
    %312 = vmatpush1.msra.mxu0 0.0
    %313 = vmatprep.subr.mxu0 0.0
    %314 = vmatpush1.msra.mxu0 %v275
    %315 = vmatprep.subr.mxu0 0.0
    %316 = vmatpush1.msra.mxu0 %v274
    %317 = vmatprep.subr.mxu0 0.0
    %318 = vmatpush1.msra.mxu0 %v273
    %319 = vmatprep.subr.mxu0 0.0
    %320 = vmatpush1.msra.mxu0 %v272
    %321 = vmatprep.subr.mxu0 0.0
    %322 = vmatpush2.msra.mxu0 0.0
    %323 = vmatprep.subr.mxu0 0.0
    %324 = vmatpush2.msra.mxu0 0.0
    %325 = vmatprep.subr.mxu0 0.0
    %326 = vmatpush2.msra.mxu0 0.0
    %327 = vmatprep.subr.mxu0 0.0
    %328 = vmatpush2.msra.mxu0 0.0
    %329 = vmatprep.subr.mxu0 0.0
    %330 = vmatpush2.msra.mxu0 0.0
    %331 = vmatprep.subr.mxu0 0.0
    %332 = vmatpush2.msra.mxu0 0.0
    %333 = vmatprep.subr.mxu0 0.0
    %334 = vmatpush2.msra.mxu0 0.0
    %335 = vmatprep.subr.mxu0 0.0
    %336 = vmatpush2.msra.mxu0 0.0
    %337 = vmatprep.subr.mxu0 0.0
    %338 = vmatpush2.msra.mxu0 0.0
    %339 = vmatprep.subr.mxu0 0.0
    %340 = vmatpush2.msra.mxu0 0.0
    %341 = vmatprep.subr.mxu0 0.0
    %342 = vmatpush2.msra.mxu0 0.0
    %343 = vmatprep.subr.mxu0 0.0
    %344 = vmatpush2.msra.mxu0 0.0
    %345 = vmatprep.subr.mxu0 0.0
    %346 = vmatpush2.msra.mxu0 0.0
    %347 = vmatprep.subr.mxu0 0.0
    %348 = vmatpush2.msra.mxu0 0.0
    %349 = vmatprep.subr.mxu0 0.0
    %350 = vmatpush2.msra.mxu0 0.0
    %351 = vmatprep.subr.mxu0 0.0
    %352 = vmatpush2.msra.mxu0 0.0
    %353 = vmatprep.mubr.f32.mxu0 0.0
    %354 = vmatmul.mubr.f32.gmra.mxu0 %v287
    %v355 = vpop.f32.mrf.mxu0
    %v356 = vadd.f32 %v284, %v355
    %v357 = vpop.f32.mrf.mxu0
    %358 = vdwg.mxu0
    %359 = vst.msk [vmem:[#allocation2] sm:$0xf] %vm270, %v356
    %s360 = scalar_lea.vmem %s6, 64
    %v361 = vld [vmem:[%s360] sm:$0xff]
    %v362 = vld [vmem:[%s360 + $0x8] sm:$0xff]
    %v363 = vld [vmem:[%s360 + $0x10] sm:$0xff]
    %v364 = vld [vmem:[%s360 + $0x18] sm:$0xff]
    %v365 = vld [vmem:[%s360 + $0x20] sm:$0xff]
    %v366 = vld [vmem:[%s360 + $0x28] sm:$0xff]
    %v367 = vld [vmem:[%s360 + $0x30] sm:$0xff]
    %v368 = vld [vmem:[%s360 + $0x38] sm:$0xff]
    %v369 = vld [vmem:[%s7 + $0x1] sm:$0x1]
    %v370 = vlaneseq
    %v371 = vshrl.u32 %v370, 7
    %v372 = vsub.s32 0, %v371
    %v373 = vrot.slane %v369, %v372
    %374 = vmatprep.subr.mxu0 0.0
    %375 = vmatpush1.msra.mxu0 0.0
    %376 = vmatprep.subr.mxu0 0.0
    %377 = vmatpush1.msra.mxu0 0.0
    %378 = vmatprep.subr.mxu0 0.0
    %379 = vmatpush1.msra.mxu0 0.0
    %380 = vmatprep.subr.mxu0 0.0
    %381 = vmatpush1.msra.mxu0 0.0
    %382 = vmatprep.subr.mxu0 0.0
    %383 = vmatpush1.msra.mxu0 0.0
    %384 = vmatprep.subr.mxu0 0.0
    %385 = vmatpush1.msra.mxu0 0.0
    %386 = vmatprep.subr.mxu0 0.0
    %387 = vmatpush1.msra.mxu0 0.0
    %388 = vmatprep.subr.mxu0 0.0
    %389 = vmatpush1.msra.mxu0 0.0
    %390 = vmatprep.subr.mxu0 0.0
    %391 = vmatpush1.msra.mxu0 0.0
    %392 = vmatprep.subr.mxu0 0.0
    %393 = vmatpush1.msra.mxu0 0.0
    %394 = vmatprep.subr.mxu0 0.0
    %395 = vmatpush1.msra.mxu0 0.0
    %396 = vmatprep.subr.mxu0 0.0
    %397 = vmatpush1.msra.mxu0 0.0
    %398 = vmatprep.subr.mxu0 0.0
    %399 = vmatpush1.msra.mxu0 %v364
    %400 = vmatprep.subr.mxu0 0.0
    %401 = vmatpush1.msra.mxu0 %v363
    %402 = vmatprep.subr.mxu0 0.0
    %403 = vmatpush1.msra.mxu0 %v362
    %404 = vmatprep.subr.mxu0 0.0
    %405 = vmatpush1.msra.mxu0 %v361
    %406 = vmatprep.subr.mxu0 0.0
    %407 = vmatpush2.msra.mxu0 0.0
    %408 = vmatprep.subr.mxu0 0.0
    %409 = vmatpush2.msra.mxu0 0.0
    %410 = vmatprep.subr.mxu0 0.0
    %411 = vmatpush2.msra.mxu0 0.0
    %412 = vmatprep.subr.mxu0 0.0
    %413 = vmatpush2.msra.mxu0 0.0
    %414 = vmatprep.subr.mxu0 0.0
    %415 = vmatpush2.msra.mxu0 0.0
    %416 = vmatprep.subr.mxu0 0.0
    %417 = vmatpush2.msra.mxu0 0.0
    %418 = vmatprep.subr.mxu0 0.0
    %419 = vmatpush2.msra.mxu0 0.0
    %420 = vmatprep.subr.mxu0 0.0
    %421 = vmatpush2.msra.mxu0 0.0
    %422 = vmatprep.subr.mxu0 0.0
    %423 = vmatpush2.msra.mxu0 0.0
    %424 = vmatprep.subr.mxu0 0.0
    %425 = vmatpush2.msra.mxu0 0.0
    %426 = vmatprep.subr.mxu0 0.0
    %427 = vmatpush2.msra.mxu0 0.0
    %428 = vmatprep.subr.mxu0 0.0
    %429 = vmatpush2.msra.mxu0 0.0
    %430 = vmatprep.subr.mxu0 0.0
    %431 = vmatpush2.msra.mxu0 0.0
    %432 = vmatprep.subr.mxu0 0.0
    %433 = vmatpush2.msra.mxu0 0.0
    %434 = vmatprep.subr.mxu0 0.0
    %435 = vmatpush2.msra.mxu0 0.0
    %436 = vmatprep.subr.mxu0 0.0
    %437 = vmatpush2.msra.mxu0 0.0
    %438 = vmatprep.mubr.f32.mxu0 0.0
    %439 = vmatmul.mubr.f32.gmra.mxu0 %v287
    %v440 = vpop.f32.mrf.mxu0
    %v441 = vadd.f32 %v373, %v440
    %v442 = vpop.f32.mrf.mxu0
    %443 = vdwg.mxu0
    %444 = vst.msk [vmem:[#allocation3] sm:$0xf] %vm270, %v441
    %s445 = scalar_lea.vmem %s6, 128
    %v446 = vld [vmem:[%s445] sm:$0xff]
    %v447 = vld [vmem:[%s445 + $0x8] sm:$0xff]
    %v448 = vld [vmem:[%s445 + $0x10] sm:$0xff]
    %v449 = vld [vmem:[%s445 + $0x18] sm:$0xff]
    %v450 = vld [vmem:[%s445 + $0x20] sm:$0xff]
    %v451 = vld [vmem:[%s445 + $0x28] sm:$0xff]
    %v452 = vld [vmem:[%s445 + $0x30] sm:$0xff]
    %v453 = vld [vmem:[%s445 + $0x38] sm:$0xff]
    %v454 = vld [vmem:[%s7 + $0x2] sm:$0x1]
    %v455 = vlaneseq
    %v456 = vshrl.u32 %v455, 7
    %v457 = vsub.s32 0, %v456
    %v458 = vrot.slane %v454, %v457
    %459 = vmatprep.subr.mxu0 0.0
    %460 = vmatpush1.msra.mxu0 0.0
    %461 = vmatprep.subr.mxu0 0.0
    %462 = vmatpush1.msra.mxu0 0.0
    %463 = vmatprep.subr.mxu0 0.0
    %464 = vmatpush1.msra.mxu0 0.0
    %465 = vmatprep.subr.mxu0 0.0
    %466 = vmatpush1.msra.mxu0 0.0
    %467 = vmatprep.subr.mxu0 0.0
    %468 = vmatpush1.msra.mxu0 0.0
    %469 = vmatprep.subr.mxu0 0.0
    %470 = vmatpush1.msra.mxu0 0.0
    %471 = vmatprep.subr.mxu0 0.0
    %472 = vmatpush1.msra.mxu0 0.0
    %473 = vmatprep.subr.mxu0 0.0
    %474 = vmatpush1.msra.mxu0 0.0
    %475 = vmatprep.subr.mxu0 0.0
    %476 = vmatpush1.msra.mxu0 0.0
    %477 = vmatprep.subr.mxu0 0.0
    %478 = vmatpush1.msra.mxu0 0.0
    %479 = vmatprep.subr.mxu0 0.0
    %480 = vmatpush1.msra.mxu0 0.0
    %481 = vmatprep.subr.mxu0 0.0
    %482 = vmatpush1.msra.mxu0 0.0
    %483 = vmatprep.subr.mxu0 0.0
    %484 = vmatpush1.msra.mxu0 %v449
    %485 = vmatprep.subr.mxu0 0.0
    %486 = vmatpush1.msra.mxu0 %v448
    %487 = vmatprep.subr.mxu0 0.0
    %488 = vmatpush1.msra.mxu0 %v447
    %489 = vmatprep.subr.mxu0 0.0
    %490 = vmatpush1.msra.mxu0 %v446
    %491 = vmatprep.subr.mxu0 0.0
    %492 = vmatpush2.msra.mxu0 0.0
    %493 = vmatprep.subr.mxu0 0.0
    %494 = vmatpush2.msra.mxu0 0.0
    %495 = vmatprep.subr.mxu0 0.0
    %496 = vmatpush2.msra.mxu0 0.0
    %497 = vmatprep.subr.mxu0 0.0
    %498 = vmatpush2.msra.mxu0 0.0
    %499 = vmatprep.subr.mxu0 0.0
    %500 = vmatpush2.msra.mxu0 0.0
    %501 = vmatprep.subr.mxu0 0.0
    %502 = vmatpush2.msra.mxu0 0.0
    %503 = vmatprep.subr.mxu0 0.0
    %504 = vmatpush2.msra.mxu0 0.0
    %505 = vmatprep.subr.mxu0 0.0
    %506 = vmatpush2.msra.mxu0 0.0
    %507 = vmatprep.subr.mxu0 0.0
    %508 = vmatpush2.msra.mxu0 0.0
    %509 = vmatprep.subr.mxu0 0.0
    %510 = vmatpush2.msra.mxu0 0.0
    %511 = vmatprep.subr.mxu0 0.0
    %512 = vmatpush2.msra.mxu0 0.0
    %513 = vmatprep.subr.mxu0 0.0
    %514 = vmatpush2.msra.mxu0 0.0
    %515 = vmatprep.subr.mxu0 0.0
    %516 = vmatpush2.msra.mxu0 0.0
    %517 = vmatprep.subr.mxu0 0.0
    %518 = vmatpush2.msra.mxu0 0.0
    %519 = vmatprep.subr.mxu0 0.0
    %520 = vmatpush2.msra.mxu0 0.0
    %521 = vmatprep.subr.mxu0 0.0
    %522 = vmatpush2.msra.mxu0 0.0
    %523 = vmatprep.mubr.f32.mxu0 0.0
    %524 = vmatmul.mubr.f32.gmra.mxu0 %v287
    %v525 = vpop.f32.mrf.mxu0
    %v526 = vadd.f32 %v458, %v525
    %v527 = vpop.f32.mrf.mxu0
    %528 = vdwg.mxu0
    %529 = vst.msk [vmem:[#allocation4] sm:$0xf] %vm270, %v526
    %s530 = scalar_lea.vmem %s6, 192
    %v531 = vld [vmem:[%s530] sm:$0xff]
    %v532 = vld [vmem:[%s530 + $0x8] sm:$0xff]
    %v533 = vld [vmem:[%s530 + $0x10] sm:$0xff]
    %v534 = vld [vmem:[%s530 + $0x18] sm:$0xff]
    %v535 = vld [vmem:[%s530 + $0x20] sm:$0xff]
    %v536 = vld [vmem:[%s530 + $0x28] sm:$0xff]
    %v537 = vld [vmem:[%s530 + $0x30] sm:$0xff]
    %v538 = vld [vmem:[%s530 + $0x38] sm:$0xff]
    %v539 = vld [vmem:[%s7 + $0x3] sm:$0x1]
    %v540 = vlaneseq
    %v541 = vshrl.u32 %v540, 7
    %v542 = vsub.s32 0, %v541
    %v543 = vrot.slane %v539, %v542
    %544 = vmatprep.subr.mxu0 0.0
    %545 = vmatpush1.msra.mxu0 0.0
    %546 = vmatprep.subr.mxu0 0.0
    %547 = vmatpush1.msra.mxu0 0.0
    %548 = vmatprep.subr.mxu0 0.0
    %549 = vmatpush1.msra.mxu0 0.0
    %550 = vmatprep.subr.mxu0 0.0
    %551 = vmatpush1.msra.mxu0 0.0
    %552 = vmatprep.subr.mxu0 0.0
    %553 = vmatpush1.msra.mxu0 0.0
    %554 = vmatprep.subr.mxu0 0.0
    %555 = vmatpush1.msra.mxu0 0.0
    %556 = vmatprep.subr.mxu0 0.0
    %557 = vmatpush1.msra.mxu0 0.0
    %558 = vmatprep.subr.mxu0 0.0
    %559 = vmatpush1.msra.mxu0 0.0
    %560 = vmatprep.subr.mxu0 0.0
    %561 = vmatpush1.msra.mxu0 0.0
    %562 = vmatprep.subr.mxu0 0.0
    %563 = vmatpush1.msra.mxu0 0.0
    %564 = vmatprep.subr.mxu0 0.0
    %565 = vmatpush1.msra.mxu0 0.0
    %566 = vmatprep.subr.mxu0 0.0
    %567 = vmatpush1.msra.mxu0 0.0
    %568 = vmatprep.subr.mxu0 0.0
    %569 = vmatpush1.msra.mxu0 %v534
    %570 = vmatprep.subr.mxu0 0.0
    %571 = vmatpush1.msra.mxu0 %v533
    %572 = vmatprep.subr.mxu0 0.0
    %573 = vmatpush1.msra.mxu0 %v532
    %574 = vmatprep.subr.mxu0 0.0
    %575 = vmatpush1.msra.mxu0 %v531
    %576 = vmatprep.subr.mxu0 0.0
    %577 = vmatpush2.msra.mxu0 0.0
    %578 = vmatprep.subr.mxu0 0.0
    %579 = vmatpush2.msra.mxu0 0.0
    %580 = vmatprep.subr.mxu0 0.0
    %581 = vmatpush2.msra.mxu0 0.0
    %582 = vmatprep.subr.mxu0 0.0
    %583 = vmatpush2.msra.mxu0 0.0
    %584 = vmatprep.subr.mxu0 0.0
    %585 = vmatpush2.msra.mxu0 0.0
    %586 = vmatprep.subr.mxu0 0.0
    %587 = vmatpush2.msra.mxu0 0.0
    %588 = vmatprep.subr.mxu0 0.0
    %589 = vmatpush2.msra.mxu0 0.0
    %590 = vmatprep.subr.mxu0 0.0
    %591 = vmatpush2.msra.mxu0 0.0
    %592 = vmatprep.subr.mxu0 0.0
    %593 = vmatpush2.msra.mxu0 0.0
    %594 = vmatprep.subr.mxu0 0.0
    %595 = vmatpush2.msra.mxu0 0.0
    %596 = vmatprep.subr.mxu0 0.0
    %597 = vmatpush2.msra.mxu0 0.0
    %598 = vmatprep.subr.mxu0 0.0
    %599 = vmatpush2.msra.mxu0 0.0
    %600 = vmatprep.subr.mxu0 0.0
    %601 = vmatpush2.msra.mxu0 0.0
    %602 = vmatprep.subr.mxu0 0.0
    %603 = vmatpush2.msra.mxu0 0.0
    %604 = vmatprep.subr.mxu0 0.0
    %605 = vmatpush2.msra.mxu0 0.0
    %606 = vmatprep.subr.mxu0 0.0
    %607 = vmatpush2.msra.mxu0 0.0
    %608 = vmatprep.mubr.f32.mxu0 0.0
    %609 = vmatmul.mubr.f32.gmra.mxu0 %v287
    %v610 = vpop.f32.mrf.mxu0
    %v611 = vadd.f32 %v543, %v610
    %v612 = vpop.f32.mrf.mxu0
    %613 = vdwg.mxu0
    %614 = vst.msk [vmem:[#allocation5] sm:$0xf] %vm270, %v611
    %v615 = vld [vmem:[#allocation2] sm:$0x1]
    %v617 = vsel %vm285, 0.0, 0
    %619 = vmatprep.subr.mxu0 0.0
    %620 = vmatpush1.msra.mxu0 0.0
    %621 = vmatprep.subr.mxu0 0.0
    %622 = vmatpush1.msra.mxu0 0.0
    %623 = vmatprep.subr.mxu0 0.0
    %624 = vmatpush1.msra.mxu0 0.0
    %625 = vmatprep.subr.mxu0 0.0
    %626 = vmatpush1.msra.mxu0 0.0
    %627 = vmatprep.subr.mxu0 0.0
    %628 = vmatpush1.msra.mxu0 0.0
    %629 = vmatprep.subr.mxu0 0.0
    %630 = vmatpush1.msra.mxu0 0.0
    %631 = vmatprep.subr.mxu0 0.0
    %632 = vmatpush1.msra.mxu0 0.0
    %633 = vmatprep.subr.mxu0 0.0
    %634 = vmatpush1.msra.mxu0 0.0
    %635 = vmatprep.subr.mxu0 0.0
    %636 = vmatpush1.msra.mxu0 0.0
    %637 = vmatprep.subr.mxu0 0.0
    %638 = vmatpush1.msra.mxu0 0.0
    %639 = vmatprep.subr.mxu0 0.0
    %640 = vmatpush1.msra.mxu0 0.0
    %641 = vmatprep.subr.mxu0 0.0
    %642 = vmatpush1.msra.mxu0 0.0
    %643 = vmatprep.subr.mxu0 0.0
    %644 = vmatpush1.msra.mxu0 %v279
    %645 = vmatprep.subr.mxu0 0.0
    %646 = vmatpush1.msra.mxu0 %v278
    %647 = vmatprep.subr.mxu0 0.0
    %648 = vmatpush1.msra.mxu0 %v277
    %649 = vmatprep.subr.mxu0 0.0
    %650 = vmatpush1.msra.mxu0 %v276
    %651 = vmatprep.subr.mxu0 0.0
    %652 = vmatpush2.msra.mxu0 0.0
    %653 = vmatprep.subr.mxu0 0.0
    %654 = vmatpush2.msra.mxu0 0.0
    %655 = vmatprep.subr.mxu0 0.0
    %656 = vmatpush2.msra.mxu0 0.0
    %657 = vmatprep.subr.mxu0 0.0
    %658 = vmatpush2.msra.mxu0 0.0
    %659 = vmatprep.subr.mxu0 0.0
    %660 = vmatpush2.msra.mxu0 0.0
    %661 = vmatprep.subr.mxu0 0.0
    %662 = vmatpush2.msra.mxu0 0.0
    %663 = vmatprep.subr.mxu0 0.0
    %664 = vmatpush2.msra.mxu0 0.0
    %665 = vmatprep.subr.mxu0 0.0
    %666 = vmatpush2.msra.mxu0 0.0
    %667 = vmatprep.subr.mxu0 0.0
    %668 = vmatpush2.msra.mxu0 0.0
    %669 = vmatprep.subr.mxu0 0.0
    %670 = vmatpush2.msra.mxu0 0.0
    %671 = vmatprep.subr.mxu0 0.0
    %672 = vmatpush2.msra.mxu0 0.0
    %673 = vmatprep.subr.mxu0 0.0
    %674 = vmatpush2.msra.mxu0 0.0
    %675 = vmatprep.subr.mxu0 0.0
    %676 = vmatpush2.msra.mxu0 0.0
    %677 = vmatprep.subr.mxu0 0.0
    %678 = vmatpush2.msra.mxu0 0.0
    %679 = vmatprep.subr.mxu0 0.0
    %680 = vmatpush2.msra.mxu0 0.0
    %681 = vmatprep.subr.mxu0 0.0
    %682 = vmatpush2.msra.mxu0 0.0
    %683 = vmatprep.mubr.f32.mxu0 0.0
    %684 = vmatmul.mubr.f32.gmra.mxu0 %v617
    %v685 = vpop.f32.mrf.mxu0
    %v686 = vadd.f32 0.0, %v685
    %v687 = vpop.f32.mrf.mxu0
    %688 = vdwg.mxu0
    %v689 = vadd.f32 %v615, %v686
    %v690 = vld [vmem:[#allocation3] sm:$0x1]
    %691 = vmatprep.subr.mxu0 0.0
    %692 = vmatpush1.msra.mxu0 0.0
    %693 = vmatprep.subr.mxu0 0.0
    %694 = vmatpush1.msra.mxu0 0.0
    %695 = vmatprep.subr.mxu0 0.0
    %696 = vmatpush1.msra.mxu0 0.0
    %697 = vmatprep.subr.mxu0 0.0
    %698 = vmatpush1.msra.mxu0 0.0
    %699 = vmatprep.subr.mxu0 0.0
    %700 = vmatpush1.msra.mxu0 0.0
    %701 = vmatprep.subr.mxu0 0.0
    %702 = vmatpush1.msra.mxu0 0.0
    %703 = vmatprep.subr.mxu0 0.0
    %704 = vmatpush1.msra.mxu0 0.0
    %705 = vmatprep.subr.mxu0 0.0
    %706 = vmatpush1.msra.mxu0 0.0
    %707 = vmatprep.subr.mxu0 0.0
    %708 = vmatpush1.msra.mxu0 0.0
    %709 = vmatprep.subr.mxu0 0.0
    %710 = vmatpush1.msra.mxu0 0.0
    %711 = vmatprep.subr.mxu0 0.0
    %712 = vmatpush1.msra.mxu0 0.0
    %713 = vmatprep.subr.mxu0 0.0
    %714 = vmatpush1.msra.mxu0 0.0
    %715 = vmatprep.subr.mxu0 0.0
    %716 = vmatpush1.msra.mxu0 %v368
    %717 = vmatprep.subr.mxu0 0.0
    %718 = vmatpush1.msra.mxu0 %v367
    %719 = vmatprep.subr.mxu0 0.0
    %720 = vmatpush1.msra.mxu0 %v366
    %721 = vmatprep.subr.mxu0 0.0
    %722 = vmatpush1.msra.mxu0 %v365
    %723 = vmatprep.subr.mxu0 0.0
    %724 = vmatpush2.msra.mxu0 0.0
    %725 = vmatprep.subr.mxu0 0.0
    %726 = vmatpush2.msra.mxu0 0.0
    %727 = vmatprep.subr.mxu0 0.0
    %728 = vmatpush2.msra.mxu0 0.0
    %729 = vmatprep.subr.mxu0 0.0
    %730 = vmatpush2.msra.mxu0 0.0
    %731 = vmatprep.subr.mxu0 0.0
    %732 = vmatpush2.msra.mxu0 0.0
    %733 = vmatprep.subr.mxu0 0.0
    %734 = vmatpush2.msra.mxu0 0.0
    %735 = vmatprep.subr.mxu0 0.0
    %736 = vmatpush2.msra.mxu0 0.0
    %737 = vmatprep.subr.mxu0 0.0
    %738 = vmatpush2.msra.mxu0 0.0
    %739 = vmatprep.subr.mxu0 0.0
    %740 = vmatpush2.msra.mxu0 0.0
    %741 = vmatprep.subr.mxu0 0.0
    %742 = vmatpush2.msra.mxu0 0.0
    %743 = vmatprep.subr.mxu0 0.0
    %744 = vmatpush2.msra.mxu0 0.0
    %745 = vmatprep.subr.mxu0 0.0
    %746 = vmatpush2.msra.mxu0 0.0
    %747 = vmatprep.subr.mxu0 0.0
    %748 = vmatpush2.msra.mxu0 0.0
    %749 = vmatprep.subr.mxu0 0.0
    %750 = vmatpush2.msra.mxu0 0.0
    %751 = vmatprep.subr.mxu0 0.0
    %752 = vmatpush2.msra.mxu0 0.0
    %753 = vmatprep.subr.mxu0 0.0
    %754 = vmatpush2.msra.mxu0 0.0
    %755 = vmatprep.mubr.f32.mxu0 0.0
    %756 = vmatmul.mubr.f32.gmra.mxu0 %v617
    %v757 = vpop.f32.mrf.mxu0
    %v758 = vadd.f32 0.0, %v757
    %v759 = vpop.f32.mrf.mxu0
    %760 = vdwg.mxu0
    %v761 = vadd.f32 %v690, %v758
    %v762 = vld [vmem:[#allocation4] sm:$0x1]
    %763 = vmatprep.subr.mxu0 0.0
    %764 = vmatpush1.msra.mxu0 0.0
    %765 = vmatprep.subr.mxu0 0.0
    %766 = vmatpush1.msra.mxu0 0.0
    %767 = vmatprep.subr.mxu0 0.0
    %768 = vmatpush1.msra.mxu0 0.0
    %769 = vmatprep.subr.mxu0 0.0
    %770 = vmatpush1.msra.mxu0 0.0
    %771 = vmatprep.subr.mxu0 0.0
    %772 = vmatpush1.msra.mxu0 0.0
    %773 = vmatprep.subr.mxu0 0.0
    %774 = vmatpush1.msra.mxu0 0.0
    %775 = vmatprep.subr.mxu0 0.0
    %776 = vmatpush1.msra.mxu0 0.0
    %777 = vmatprep.subr.mxu0 0.0
    %778 = vmatpush1.msra.mxu0 0.0
    %779 = vmatprep.subr.mxu0 0.0
    %780 = vmatpush1.msra.mxu0 0.0
    %781 = vmatprep.subr.mxu0 0.0
    %782 = vmatpush1.msra.mxu0 0.0
    %783 = vmatprep.subr.mxu0 0.0
    %784 = vmatpush1.msra.mxu0 0.0
    %785 = vmatprep.subr.mxu0 0.0
    %786 = vmatpush1.msra.mxu0 0.0
    %787 = vmatprep.subr.mxu0 0.0
    %788 = vmatpush1.msra.mxu0 %v453
    %789 = vmatprep.subr.mxu0 0.0
    %790 = vmatpush1.msra.mxu0 %v452
    %791 = vmatprep.subr.mxu0 0.0
    %792 = vmatpush1.msra.mxu0 %v451
    %793 = vmatprep.subr.mxu0 0.0
    %794 = vmatpush1.msra.mxu0 %v450
    %795 = vmatprep.subr.mxu0 0.0
    %796 = vmatpush2.msra.mxu0 0.0
    %797 = vmatprep.subr.mxu0 0.0
    %798 = vmatpush2.msra.mxu0 0.0
    %799 = vmatprep.subr.mxu0 0.0
    %800 = vmatpush2.msra.mxu0 0.0
    %801 = vmatprep.subr.mxu0 0.0
    %802 = vmatpush2.msra.mxu0 0.0
    %803 = vmatprep.subr.mxu0 0.0
    %804 = vmatpush2.msra.mxu0 0.0
    %805 = vmatprep.subr.mxu0 0.0
    %806 = vmatpush2.msra.mxu0 0.0
    %807 = vmatprep.subr.mxu0 0.0
    %808 = vmatpush2.msra.mxu0 0.0
    %809 = vmatprep.subr.mxu0 0.0
    %810 = vmatpush2.msra.mxu0 0.0
    %811 = vmatprep.subr.mxu0 0.0
    %812 = vmatpush2.msra.mxu0 0.0
    %813 = vmatprep.subr.mxu0 0.0
    %814 = vmatpush2.msra.mxu0 0.0
    %815 = vmatprep.subr.mxu0 0.0
    %816 = vmatpush2.msra.mxu0 0.0
    %817 = vmatprep.subr.mxu0 0.0
    %818 = vmatpush2.msra.mxu0 0.0
    %819 = vmatprep.subr.mxu0 0.0
    %820 = vmatpush2.msra.mxu0 0.0
    %821 = vmatprep.subr.mxu0 0.0
    %822 = vmatpush2.msra.mxu0 0.0
    %823 = vmatprep.subr.mxu0 0.0
    %824 = vmatpush2.msra.mxu0 0.0
    %825 = vmatprep.subr.mxu0 0.0
    %826 = vmatpush2.msra.mxu0 0.0
    %827 = vmatprep.mubr.f32.mxu0 0.0
    %828 = vmatmul.mubr.f32.gmra.mxu0 %v617
    %v829 = vpop.f32.mrf.mxu0
    %v830 = vadd.f32 0.0, %v829
    %v831 = vpop.f32.mrf.mxu0
    %832 = vdwg.mxu0
    %v833 = vadd.f32 %v762, %v830
    %v834 = vld [vmem:[#allocation5] sm:$0x1]
    %835 = vmatprep.subr.mxu0 0.0
    %836 = vmatpush1.msra.mxu0 0.0
    %837 = vmatprep.subr.mxu0 0.0
    %838 = vmatpush1.msra.mxu0 0.0
    %839 = vmatprep.subr.mxu0 0.0
    %840 = vmatpush1.msra.mxu0 0.0
    %841 = vmatprep.subr.mxu0 0.0
    %842 = vmatpush1.msra.mxu0 0.0
    %843 = vmatprep.subr.mxu0 0.0
    %844 = vmatpush1.msra.mxu0 0.0
    %845 = vmatprep.subr.mxu0 0.0
    %846 = vmatpush1.msra.mxu0 0.0
    %847 = vmatprep.subr.mxu0 0.0
    %848 = vmatpush1.msra.mxu0 0.0
    %849 = vmatprep.subr.mxu0 0.0
    %850 = vmatpush1.msra.mxu0 0.0
    %851 = vmatprep.subr.mxu0 0.0
    %852 = vmatpush1.msra.mxu0 0.0
    %853 = vmatprep.subr.mxu0 0.0
    %854 = vmatpush1.msra.mxu0 0.0
    %855 = vmatprep.subr.mxu0 0.0
    %856 = vmatpush1.msra.mxu0 0.0
    %857 = vmatprep.subr.mxu0 0.0
    %858 = vmatpush1.msra.mxu0 0.0
    %859 = vmatprep.subr.mxu0 0.0
    %860 = vmatpush1.msra.mxu0 %v538
    %861 = vmatprep.subr.mxu0 0.0
    %862 = vmatpush1.msra.mxu0 %v537
    %863 = vmatprep.subr.mxu0 0.0
    %864 = vmatpush1.msra.mxu0 %v536
    %865 = vmatprep.subr.mxu0 0.0
    %866 = vmatpush1.msra.mxu0 %v535
    %867 = vmatprep.subr.mxu0 0.0
    %868 = vmatpush2.msra.mxu0 0.0
    %869 = vmatprep.subr.mxu0 0.0
    %870 = vmatpush2.msra.mxu0 0.0
    %871 = vmatprep.subr.mxu0 0.0
    %872 = vmatpush2.msra.mxu0 0.0
    %873 = vmatprep.subr.mxu0 0.0
    %874 = vmatpush2.msra.mxu0 0.0
    %875 = vmatprep.subr.mxu0 0.0
    %876 = vmatpush2.msra.mxu0 0.0
    %877 = vmatprep.subr.mxu0 0.0
    %878 = vmatpush2.msra.mxu0 0.0
    %879 = vmatprep.subr.mxu0 0.0
    %880 = vmatpush2.msra.mxu0 0.0
    %881 = vmatprep.subr.mxu0 0.0
    %882 = vmatpush2.msra.mxu0 0.0
    %883 = vmatprep.subr.mxu0 0.0
    %884 = vmatpush2.msra.mxu0 0.0
    %885 = vmatprep.subr.mxu0 0.0
    %886 = vmatpush2.msra.mxu0 0.0
    %887 = vmatprep.subr.mxu0 0.0
    %888 = vmatpush2.msra.mxu0 0.0
    %889 = vmatprep.subr.mxu0 0.0
    %890 = vmatpush2.msra.mxu0 0.0
    %891 = vmatprep.subr.mxu0 0.0
    %892 = vmatpush2.msra.mxu0 0.0
    %893 = vmatprep.subr.mxu0 0.0
    %894 = vmatpush2.msra.mxu0 0.0
    %895 = vmatprep.subr.mxu0 0.0
    %896 = vmatpush2.msra.mxu0 0.0
    %897 = vmatprep.subr.mxu0 0.0
    %898 = vmatpush2.msra.mxu0 0.0
    %899 = vmatprep.mubr.f32.mxu0 0.0
    %900 = vmatmul.mubr.f32.gmra.mxu0 %v617
    %v901 = vpop.f32.mrf.mxu0
    %v902 = vadd.f32 0.0, %v901
    %v903 = vpop.f32.mrf.mxu0
    %904 = vdwg.mxu0
    %v905 = vadd.f32 %v834, %v902
    %v906 = vxor.u32 %v689, 2147483648
    %v907 = vmul.f32 %v906, 1.442695
    %v908 = vpow.pop %v907
    %v909 = vadd.f32 %v908, 1.0
    %v910 = vrcp.pop %v909
    %v911 = vmul.f32 1.0, %v910
    %v912 = vxor.u32 %v761, 2147483648
    %v913 = vmul.f32 %v912, 1.442695
    %v914 = vpow.pop %v913
    %v915 = vadd.f32 %v914, 1.0
    %v916 = vrcp.pop %v915
    %v917 = vmul.f32 1.0, %v916
    %v918 = vtanh.pop %v833
    %v919 = vxor.u32 %v905, 2147483648
    %v920 = vmul.f32 %v919, 1.442695
    %v921 = vpow.pop %v920
    %v922 = vadd.f32 %v921, 1.0
    %v923 = vrcp.pop %v922
    %v924 = vmul.f32 1.0, %v923
    %v925 = vmul.f32 %v917, 0.0
    %v926 = vmul.f32 %v911, %v918
    %v927 = vadd.f32 %v925, %v926
    %v928 = vtanh.pop %v927
    %v929 = vmul.f32 %v924, %v928
    %vm930 = vcmask 253952
    %931 = vst.msk [vmem:[#allocation8] sm:$0x1] %vm930, %v929
    %v932 = vld [vmem:[#allocation2 + $0x1] sm:$0x1]
    %v934 = vsel %vm285, %v929, 0
    %936 = vmatprep.subr.mxu0 0.0
    %937 = vmatpush1.msra.mxu0 0.0
    %938 = vmatprep.subr.mxu0 0.0
    %939 = vmatpush1.msra.mxu0 0.0
    %940 = vmatprep.subr.mxu0 0.0
    %941 = vmatpush1.msra.mxu0 0.0
    %942 = vmatprep.subr.mxu0 0.0
    %943 = vmatpush1.msra.mxu0 0.0
    %944 = vmatprep.subr.mxu0 0.0
    %945 = vmatpush1.msra.mxu0 0.0
    %946 = vmatprep.subr.mxu0 0.0
    %947 = vmatpush1.msra.mxu0 0.0
    %948 = vmatprep.subr.mxu0 0.0
    %949 = vmatpush1.msra.mxu0 0.0
    %950 = vmatprep.subr.mxu0 0.0
    %951 = vmatpush1.msra.mxu0 0.0
    %952 = vmatprep.subr.mxu0 0.0
    %953 = vmatpush1.msra.mxu0 0.0
    %954 = vmatprep.subr.mxu0 0.0
    %955 = vmatpush1.msra.mxu0 0.0
    %956 = vmatprep.subr.mxu0 0.0
    %957 = vmatpush1.msra.mxu0 0.0
    %958 = vmatprep.subr.mxu0 0.0
    %959 = vmatpush1.msra.mxu0 0.0
    %960 = vmatprep.subr.mxu0 0.0
    %961 = vmatpush1.msra.mxu0 %v279
    %962 = vmatprep.subr.mxu0 0.0
    %963 = vmatpush1.msra.mxu0 %v278
    %964 = vmatprep.subr.mxu0 0.0
    %965 = vmatpush1.msra.mxu0 %v277
    %966 = vmatprep.subr.mxu0 0.0
    %967 = vmatpush1.msra.mxu0 %v276
    %968 = vmatprep.subr.mxu0 0.0
    %969 = vmatpush2.msra.mxu0 0.0
    %970 = vmatprep.subr.mxu0 0.0
    %971 = vmatpush2.msra.mxu0 0.0
    %972 = vmatprep.subr.mxu0 0.0
    %973 = vmatpush2.msra.mxu0 0.0
    %974 = vmatprep.subr.mxu0 0.0
    %975 = vmatpush2.msra.mxu0 0.0
    %976 = vmatprep.subr.mxu0 0.0
    %977 = vmatpush2.msra.mxu0 0.0
    %978 = vmatprep.subr.mxu0 0.0
    %979 = vmatpush2.msra.mxu0 0.0
    %980 = vmatprep.subr.mxu0 0.0
    %981 = vmatpush2.msra.mxu0 0.0
    %982 = vmatprep.subr.mxu0 0.0
    %983 = vmatpush2.msra.mxu0 0.0
    %984 = vmatprep.subr.mxu0 0.0
    %985 = vmatpush2.msra.mxu0 0.0
    %986 = vmatprep.subr.mxu0 0.0
    %987 = vmatpush2.msra.mxu0 0.0
    %988 = vmatprep.subr.mxu0 0.0
    %989 = vmatpush2.msra.mxu0 0.0
    %990 = vmatprep.subr.mxu0 0.0
    %991 = vmatpush2.msra.mxu0 0.0
    %992 = vmatprep.subr.mxu0 0.0
    %993 = vmatpush2.msra.mxu0 0.0
    %994 = vmatprep.subr.mxu0 0.0
    %995 = vmatpush2.msra.mxu0 0.0
    %996 = vmatprep.subr.mxu0 0.0
    %997 = vmatpush2.msra.mxu0 0.0
    %998 = vmatprep.subr.mxu0 0.0
    %999 = vmatpush2.msra.mxu0 0.0
    %1000 = vmatprep.mubr.f32.mxu0 0.0
    %1001 = vmatmul.mubr.f32.gmra.mxu0 %v934
    %v1002 = vpop.f32.mrf.mxu0
    %v1003 = vadd.f32 0.0, %v1002
    %v1004 = vpop.f32.mrf.mxu0
    %1005 = vdwg.mxu0
    %v1006 = vadd.f32 %v932, %v1003
    %v1007 = vld [vmem:[#allocation3 + $0x1] sm:$0x1]
    %1008 = vmatprep.subr.mxu0 0.0
    %1009 = vmatpush1.msra.mxu0 0.0
    %1010 = vmatprep.subr.mxu0 0.0
    %1011 = vmatpush1.msra.mxu0 0.0
    %1012 = vmatprep.subr.mxu0 0.0
    %1013 = vmatpush1.msra.mxu0 0.0
    %1014 = vmatprep.subr.mxu0 0.0
    %1015 = vmatpush1.msra.mxu0 0.0
    %1016 = vmatprep.subr.mxu0 0.0
    %1017 = vmatpush1.msra.mxu0 0.0
    %1018 = vmatprep.subr.mxu0 0.0
    %1019 = vmatpush1.msra.mxu0 0.0
    %1020 = vmatprep.subr.mxu0 0.0
    %1021 = vmatpush1.msra.mxu0 0.0
    %1022 = vmatprep.subr.mxu0 0.0
    %1023 = vmatpush1.msra.mxu0 0.0
    %1024 = vmatprep.subr.mxu0 0.0
    %1025 = vmatpush1.msra.mxu0 0.0
    %1026 = vmatprep.subr.mxu0 0.0
    %1027 = vmatpush1.msra.mxu0 0.0
    %1028 = vmatprep.subr.mxu0 0.0
    %1029 = vmatpush1.msra.mxu0 0.0
    %1030 = vmatprep.subr.mxu0 0.0
    %1031 = vmatpush1.msra.mxu0 0.0
    %1032 = vmatprep.subr.mxu0 0.0
    %1033 = vmatpush1.msra.mxu0 %v368
    %1034 = vmatprep.subr.mxu0 0.0
    %1035 = vmatpush1.msra.mxu0 %v367
    %1036 = vmatprep.subr.mxu0 0.0
    %1037 = vmatpush1.msra.mxu0 %v366
    %1038 = vmatprep.subr.mxu0 0.0
    %1039 = vmatpush1.msra.mxu0 %v365
    %1040 = vmatprep.subr.mxu0 0.0
    %1041 = vmatpush2.msra.mxu0 0.0
    %1042 = vmatprep.subr.mxu0 0.0
    %1043 = vmatpush2.msra.mxu0 0.0
    %1044 = vmatprep.subr.mxu0 0.0
    %1045 = vmatpush2.msra.mxu0 0.0
    %1046 = vmatprep.subr.mxu0 0.0
    %1047 = vmatpush2.msra.mxu0 0.0
    %1048 = vmatprep.subr.mxu0 0.0
    %1049 = vmatpush2.msra.mxu0 0.0
    %1050 = vmatprep.subr.mxu0 0.0
    %1051 = vmatpush2.msra.mxu0 0.0
    %1052 = vmatprep.subr.mxu0 0.0
    %1053 = vmatpush2.msra.mxu0 0.0
    %1054 = vmatprep.subr.mxu0 0.0
    %1055 = vmatpush2.msra.mxu0 0.0
    %1056 = vmatprep.subr.mxu0 0.0
    %1057 = vmatpush2.msra.mxu0 0.0
    %1058 = vmatprep.subr.mxu0 0.0
    %1059 = vmatpush2.msra.mxu0 0.0
    %1060 = vmatprep.subr.mxu0 0.0
    %1061 = vmatpush2.msra.mxu0 0.0
    %1062 = vmatprep.subr.mxu0 0.0
    %1063 = vmatpush2.msra.mxu0 0.0
    %1064 = vmatprep.subr.mxu0 0.0
    %1065 = vmatpush2.msra.mxu0 0.0
    %1066 = vmatprep.subr.mxu0 0.0
    %1067 = vmatpush2.msra.mxu0 0.0
    %1068 = vmatprep.subr.mxu0 0.0
    %1069 = vmatpush2.msra.mxu0 0.0
    %1070 = vmatprep.subr.mxu0 0.0
    %1071 = vmatpush2.msra.mxu0 0.0
    %1072 = vmatprep.mubr.f32.mxu0 0.0
    %1073 = vmatmul.mubr.f32.gmra.mxu0 %v934
    %v1074 = vpop.f32.mrf.mxu0
    %v1075 = vadd.f32 0.0, %v1074
    %v1076 = vpop.f32.mrf.mxu0
    %1077 = vdwg.mxu0
    %v1078 = vadd.f32 %v1007, %v1075
    %v1079 = vld [vmem:[#allocation4 + $0x1] sm:$0x1]
    %1080 = vmatprep.subr.mxu0 0.0
    %1081 = vmatpush1.msra.mxu0 0.0
    %1082 = vmatprep.subr.mxu0 0.0
    %1083 = vmatpush1.msra.mxu0 0.0
    %1084 = vmatprep.subr.mxu0 0.0
    %1085 = vmatpush1.msra.mxu0 0.0
    %1086 = vmatprep.subr.mxu0 0.0
    %1087 = vmatpush1.msra.mxu0 0.0
    %1088 = vmatprep.subr.mxu0 0.0
    %1089 = vmatpush1.msra.mxu0 0.0
    %1090 = vmatprep.subr.mxu0 0.0
    %1091 = vmatpush1.msra.mxu0 0.0
    %1092 = vmatprep.subr.mxu0 0.0
    %1093 = vmatpush1.msra.mxu0 0.0
    %1094 = vmatprep.subr.mxu0 0.0
    %1095 = vmatpush1.msra.mxu0 0.0
    %1096 = vmatprep.subr.mxu0 0.0
    %1097 = vmatpush1.msra.mxu0 0.0
    %1098 = vmatprep.subr.mxu0 0.0
    %1099 = vmatpush1.msra.mxu0 0.0
    %1100 = vmatprep.subr.mxu0 0.0
    %1101 = vmatpush1.msra.mxu0 0.0
    %1102 = vmatprep.subr.mxu0 0.0
    %1103 = vmatpush1.msra.mxu0 0.0
    %1104 = vmatprep.subr.mxu0 0.0
    %1105 = vmatpush1.msra.mxu0 %v453
    %1106 = vmatprep.subr.mxu0 0.0
    %1107 = vmatpush1.msra.mxu0 %v452
    %1108 = vmatprep.subr.mxu0 0.0
    %1109 = vmatpush1.msra.mxu0 %v451
    %1110 = vmatprep.subr.mxu0 0.0
    %1111 = vmatpush1.msra.mxu0 %v450
    %1112 = vmatprep.subr.mxu0 0.0
    %1113 = vmatpush2.msra.mxu0 0.0
    %1114 = vmatprep.subr.mxu0 0.0
    %1115 = vmatpush2.msra.mxu0 0.0
    %1116 = vmatprep.subr.mxu0 0.0
    %1117 = vmatpush2.msra.mxu0 0.0
    %1118 = vmatprep.subr.mxu0 0.0
    %1119 = vmatpush2.msra.mxu0 0.0
    %1120 = vmatprep.subr.mxu0 0.0
    %1121 = vmatpush2.msra.mxu0 0.0
    %1122 = vmatprep.subr.mxu0 0.0
    %1123 = vmatpush2.msra.mxu0 0.0
    %1124 = vmatprep.subr.mxu0 0.0
    %1125 = vmatpush2.msra.mxu0 0.0
    %1126 = vmatprep.subr.mxu0 0.0
    %1127 = vmatpush2.msra.mxu0 0.0
    %1128 = vmatprep.subr.mxu0 0.0
    %1129 = vmatpush2.msra.mxu0 0.0
    %1130 = vmatprep.subr.mxu0 0.0
    %1131 = vmatpush2.msra.mxu0 0.0
    %1132 = vmatprep.subr.mxu0 0.0
    %1133 = vmatpush2.msra.mxu0 0.0
    %1134 = vmatprep.subr.mxu0 0.0
    %1135 = vmatpush2.msra.mxu0 0.0
    %1136 = vmatprep.subr.mxu0 0.0
    %1137 = vmatpush2.msra.mxu0 0.0
    %1138 = vmatprep.subr.mxu0 0.0
    %1139 = vmatpush2.msra.mxu0 0.0
    %1140 = vmatprep.subr.mxu0 0.0
    %1141 = vmatpush2.msra.mxu0 0.0
    %1142 = vmatprep.subr.mxu0 0.0
    %1143 = vmatpush2.msra.mxu0 0.0
    %1144 = vmatprep.mubr.f32.mxu0 0.0
    %1145 = vmatmul.mubr.f32.gmra.mxu0 %v934
    %v1146 = vpop.f32.mrf.mxu0
    %v1147 = vadd.f32 0.0, %v1146
    %v1148 = vpop.f32.mrf.mxu0
    %1149 = vdwg.mxu0
    %v1150 = vadd.f32 %v1079, %v1147
    %v1151 = vld [vmem:[#allocation5 + $0x1] sm:$0x1]
    %1152 = vmatprep.subr.mxu0 0.0
    %1153 = vmatpush1.msra.mxu0 0.0
    %1154 = vmatprep.subr.mxu0 0.0
    %1155 = vmatpush1.msra.mxu0 0.0
    %1156 = vmatprep.subr.mxu0 0.0
    %1157 = vmatpush1.msra.mxu0 0.0
    %1158 = vmatprep.subr.mxu0 0.0
    %1159 = vmatpush1.msra.mxu0 0.0
    %1160 = vmatprep.subr.mxu0 0.0
    %1161 = vmatpush1.msra.mxu0 0.0
    %1162 = vmatprep.subr.mxu0 0.0
    %1163 = vmatpush1.msra.mxu0 0.0
    %1164 = vmatprep.subr.mxu0 0.0
    %1165 = vmatpush1.msra.mxu0 0.0
    %1166 = vmatprep.subr.mxu0 0.0
    %1167 = vmatpush1.msra.mxu0 0.0
    %1168 = vmatprep.subr.mxu0 0.0
    %1169 = vmatpush1.msra.mxu0 0.0
    %1170 = vmatprep.subr.mxu0 0.0
    %1171 = vmatpush1.msra.mxu0 0.0
    %1172 = vmatprep.subr.mxu0 0.0
    %1173 = vmatpush1.msra.mxu0 0.0
    %1174 = vmatprep.subr.mxu0 0.0
    %1175 = vmatpush1.msra.mxu0 0.0
    %1176 = vmatprep.subr.mxu0 0.0
    %1177 = vmatpush1.msra.mxu0 %v538
    %1178 = vmatprep.subr.mxu0 0.0
    %1179 = vmatpush1.msra.mxu0 %v537
    %1180 = vmatprep.subr.mxu0 0.0
    %1181 = vmatpush1.msra.mxu0 %v536
    %1182 = vmatprep.subr.mxu0 0.0
    %1183 = vmatpush1.msra.mxu0 %v535
    %1184 = vmatprep.subr.mxu0 0.0
    %1185 = vmatpush2.msra.mxu0 0.0
    %1186 = vmatprep.subr.mxu0 0.0
    %1187 = vmatpush2.msra.mxu0 0.0
    %1188 = vmatprep.subr.mxu0 0.0
    %1189 = vmatpush2.msra.mxu0 0.0
    %1190 = vmatprep.subr.mxu0 0.0
    %1191 = vmatpush2.msra.mxu0 0.0
    %1192 = vmatprep.subr.mxu0 0.0
    %1193 = vmatpush2.msra.mxu0 0.0
    %1194 = vmatprep.subr.mxu0 0.0
    %1195 = vmatpush2.msra.mxu0 0.0
    %1196 = vmatprep.subr.mxu0 0.0
    %1197 = vmatpush2.msra.mxu0 0.0
    %1198 = vmatprep.subr.mxu0 0.0
    %1199 = vmatpush2.msra.mxu0 0.0
    %1200 = vmatprep.subr.mxu0 0.0
    %1201 = vmatpush2.msra.mxu0 0.0
    %1202 = vmatprep.subr.mxu0 0.0
    %1203 = vmatpush2.msra.mxu0 0.0
    %1204 = vmatprep.subr.mxu0 0.0
    %1205 = vmatpush2.msra.mxu0 0.0
    %1206 = vmatprep.subr.mxu0 0.0
    %1207 = vmatpush2.msra.mxu0 0.0
    %1208 = vmatprep.subr.mxu0 0.0
    %1209 = vmatpush2.msra.mxu0 0.0
    %1210 = vmatprep.subr.mxu0 0.0
    %1211 = vmatpush2.msra.mxu0 0.0
    %1212 = vmatprep.subr.mxu0 0.0
    %1213 = vmatpush2.msra.mxu0 0.0
    %1214 = vmatprep.subr.mxu0 0.0
    %1215 = vmatpush2.msra.mxu0 0.0
    %1216 = vmatprep.mubr.f32.mxu0 0.0
    %1217 = vmatmul.mubr.f32.gmra.mxu0 %v934
    %v1218 = vpop.f32.mrf.mxu0
    %v1219 = vadd.f32 0.0, %v1218
    %v1220 = vpop.f32.mrf.mxu0
    %1221 = vdwg.mxu0
    %v1222 = vadd.f32 %v1151, %v1219
    %v1223 = vxor.u32 %v1006, 2147483648
    %v1224 = vmul.f32 %v1223, 1.442695
    %v1225 = vpow.pop %v1224
    %v1226 = vadd.f32 %v1225, 1.0
    %v1227 = vrcp.pop %v1226
    %v1228 = vmul.f32 1.0, %v1227
    %v1229 = vxor.u32 %v1078, 2147483648
    %v1230 = vmul.f32 %v1229, 1.442695
    %v1231 = vpow.pop %v1230
    %v1232 = vadd.f32 %v1231, 1.0
    %v1233 = vrcp.pop %v1232
    %v1234 = vmul.f32 1.0, %v1233
    %v1235 = vtanh.pop %v1150
    %v1236 = vxor.u32 %v1222, 2147483648
    %v1237 = vmul.f32 %v1236, 1.442695
    %v1238 = vpow.pop %v1237
    %v1239 = vadd.f32 %v1238, 1.0
    %v1240 = vrcp.pop %v1239
    %v1241 = vmul.f32 1.0, %v1240
    %v1242 = vmul.f32 %v1234, %v927
    %v1243 = vmul.f32 %v1228, %v1235
    %v1244 = vadd.f32 %v1242, %v1243
    %v1245 = vtanh.pop %v1244
    %v1246 = vmul.f32 %v1241, %v1245
    %1247 = vst.msk [vmem:[#allocation8 + $0x1] sm:$0x1] %vm930, %v1246
    %v1248 = vld [vmem:[#allocation2 + $0x2] sm:$0x1]
    %v1250 = vsel %vm285, %v1246, 0
    %1252 = vmatprep.subr.mxu0 0.0
    %1253 = vmatpush1.msra.mxu0 0.0
    %1254 = vmatprep.subr.mxu0 0.0
    %1255 = vmatpush1.msra.mxu0 0.0
    %1256 = vmatprep.subr.mxu0 0.0
    %1257 = vmatpush1.msra.mxu0 0.0
    %1258 = vmatprep.subr.mxu0 0.0
    %1259 = vmatpush1.msra.mxu0 0.0
    %1260 = vmatprep.subr.mxu0 0.0
    %1261 = vmatpush1.msra.mxu0 0.0
    %1262 = vmatprep.subr.mxu0 0.0
    %1263 = vmatpush1.msra.mxu0 0.0
    %1264 = vmatprep.subr.mxu0 0.0
    %1265 = vmatpush1.msra.mxu0 0.0
    %1266 = vmatprep.subr.mxu0 0.0
    %1267 = vmatpush1.msra.mxu0 0.0
    %1268 = vmatprep.subr.mxu0 0.0
    %1269 = vmatpush1.msra.mxu0 0.0
    %1270 = vmatprep.subr.mxu0 0.0
    %1271 = vmatpush1.msra.mxu0 0.0
    %1272 = vmatprep.subr.mxu0 0.0
    %1273 = vmatpush1.msra.mxu0 0.0
    %1274 = vmatprep.subr.mxu0 0.0
    %1275 = vmatpush1.msra.mxu0 0.0
    %1276 = vmatprep.subr.mxu0 0.0
    %1277 = vmatpush1.msra.mxu0 %v279
    %1278 = vmatprep.subr.mxu0 0.0
    %1279 = vmatpush1.msra.mxu0 %v278
    %1280 = vmatprep.subr.mxu0 0.0
    %1281 = vmatpush1.msra.mxu0 %v277
    %1282 = vmatprep.subr.mxu0 0.0
    %1283 = vmatpush1.msra.mxu0 %v276
    %1284 = vmatprep.subr.mxu0 0.0
    %1285 = vmatpush2.msra.mxu0 0.0
    %1286 = vmatprep.subr.mxu0 0.0
    %1287 = vmatpush2.msra.mxu0 0.0
    %1288 = vmatprep.subr.mxu0 0.0
    %1289 = vmatpush2.msra.mxu0 0.0
    %1290 = vmatprep.subr.mxu0 0.0
    %1291 = vmatpush2.msra.mxu0 0.0
    %1292 = vmatprep.subr.mxu0 0.0
    %1293 = vmatpush2.msra.mxu0 0.0
    %1294 = vmatprep.subr.mxu0 0.0
    %1295 = vmatpush2.msra.mxu0 0.0
    %1296 = vmatprep.subr.mxu0 0.0
    %1297 = vmatpush2.msra.mxu0 0.0
    %1298 = vmatprep.subr.mxu0 0.0
    %1299 = vmatpush2.msra.mxu0 0.0
    %1300 = vmatprep.subr.mxu0 0.0
    %1301 = vmatpush2.msra.mxu0 0.0
    %1302 = vmatprep.subr.mxu0 0.0
    %1303 = vmatpush2.msra.mxu0 0.0
    %1304 = vmatprep.subr.mxu0 0.0
    %1305 = vmatpush2.msra.mxu0 0.0
    %1306 = vmatprep.subr.mxu0 0.0
    %1307 = vmatpush2.msra.mxu0 0.0
    %1308 = vmatprep.subr.mxu0 0.0
    %1309 = vmatpush2.msra.mxu0 0.0
    %1310 = vmatprep.subr.mxu0 0.0
    %1311 = vmatpush2.msra.mxu0 0.0
    %1312 = vmatprep.subr.mxu0 0.0
    %1313 = vmatpush2.msra.mxu0 0.0
    %1314 = vmatprep.subr.mxu0 0.0
    %1315 = vmatpush2.msra.mxu0 0.0
    %1316 = vmatprep.mubr.f32.mxu0 0.0
    %1317 = vmatmul.mubr.f32.gmra.mxu0 %v1250
    %v1318 = vpop.f32.mrf.mxu0
    %v1319 = vadd.f32 0.0, %v1318
    %v1320 = vpop.f32.mrf.mxu0
    %1321 = vdwg.mxu0
    %v1322 = vadd.f32 %v1248, %v1319
    %v1323 = vld [vmem:[#allocation3 + $0x2] sm:$0x1]
    %1324 = vmatprep.subr.mxu0 0.0
    %1325 = vmatpush1.msra.mxu0 0.0
    %1326 = vmatprep.subr.mxu0 0.0
    %1327 = vmatpush1.msra.mxu0 0.0
    %1328 = vmatprep.subr.mxu0 0.0
    %1329 = vmatpush1.msra.mxu0 0.0
    %1330 = vmatprep.subr.mxu0 0.0
    %1331 = vmatpush1.msra.mxu0 0.0
    %1332 = vmatprep.subr.mxu0 0.0
    %1333 = vmatpush1.msra.mxu0 0.0
    %1334 = vmatprep.subr.mxu0 0.0
    %1335 = vmatpush1.msra.mxu0 0.0
    %1336 = vmatprep.subr.mxu0 0.0
    %1337 = vmatpush1.msra.mxu0 0.0
    %1338 = vmatprep.subr.mxu0 0.0
    %1339 = vmatpush1.msra.mxu0 0.0
    %1340 = vmatprep.subr.mxu0 0.0
    %1341 = vmatpush1.msra.mxu0 0.0
    %1342 = vmatprep.subr.mxu0 0.0
    %1343 = vmatpush1.msra.mxu0 0.0
    %1344 = vmatprep.subr.mxu0 0.0
    %1345 = vmatpush1.msra.mxu0 0.0
    %1346 = vmatprep.subr.mxu0 0.0
    %1347 = vmatpush1.msra.mxu0 0.0
    %1348 = vmatprep.subr.mxu0 0.0
    %1349 = vmatpush1.msra.mxu0 %v368
    %1350 = vmatprep.subr.mxu0 0.0
    %1351 = vmatpush1.msra.mxu0 %v367
    %1352 = vmatprep.subr.mxu0 0.0
    %1353 = vmatpush1.msra.mxu0 %v366
    %1354 = vmatprep.subr.mxu0 0.0
    %1355 = vmatpush1.msra.mxu0 %v365
    %1356 = vmatprep.subr.mxu0 0.0
    %1357 = vmatpush2.msra.mxu0 0.0
    %1358 = vmatprep.subr.mxu0 0.0
    %1359 = vmatpush2.msra.mxu0 0.0
    %1360 = vmatprep.subr.mxu0 0.0
    %1361 = vmatpush2.msra.mxu0 0.0
    %1362 = vmatprep.subr.mxu0 0.0
    %1363 = vmatpush2.msra.mxu0 0.0
    %1364 = vmatprep.subr.mxu0 0.0
    %1365 = vmatpush2.msra.mxu0 0.0
    %1366 = vmatprep.subr.mxu0 0.0
    %1367 = vmatpush2.msra.mxu0 0.0
    %1368 = vmatprep.subr.mxu0 0.0
    %1369 = vmatpush2.msra.mxu0 0.0
    %1370 = vmatprep.subr.mxu0 0.0
    %1371 = vmatpush2.msra.mxu0 0.0
    %1372 = vmatprep.subr.mxu0 0.0
    %1373 = vmatpush2.msra.mxu0 0.0
    %1374 = vmatprep.subr.mxu0 0.0
    %1375 = vmatpush2.msra.mxu0 0.0
    %1376 = vmatprep.subr.mxu0 0.0
    %1377 = vmatpush2.msra.mxu0 0.0
    %1378 = vmatprep.subr.mxu0 0.0
    %1379 = vmatpush2.msra.mxu0 0.0
    %1380 = vmatprep.subr.mxu0 0.0
    %1381 = vmatpush2.msra.mxu0 0.0
    %1382 = vmatprep.subr.mxu0 0.0
    %1383 = vmatpush2.msra.mxu0 0.0
    %1384 = vmatprep.subr.mxu0 0.0
    %1385 = vmatpush2.msra.mxu0 0.0
    %1386 = vmatprep.subr.mxu0 0.0
    %1387 = vmatpush2.msra.mxu0 0.0
    %1388 = vmatprep.mubr.f32.mxu0 0.0
    %1389 = vmatmul.mubr.f32.gmra.mxu0 %v1250
    %v1390 = vpop.f32.mrf.mxu0
    %v1391 = vadd.f32 0.0, %v1390
    %v1392 = vpop.f32.mrf.mxu0
    %1393 = vdwg.mxu0
    %v1394 = vadd.f32 %v1323, %v1391
    %v1395 = vld [vmem:[#allocation4 + $0x2] sm:$0x1]
    %1396 = vmatprep.subr.mxu0 0.0
    %1397 = vmatpush1.msra.mxu0 0.0
    %1398 = vmatprep.subr.mxu0 0.0
    %1399 = vmatpush1.msra.mxu0 0.0
    %1400 = vmatprep.subr.mxu0 0.0
    %1401 = vmatpush1.msra.mxu0 0.0
    %1402 = vmatprep.subr.mxu0 0.0
    %1403 = vmatpush1.msra.mxu0 0.0
    %1404 = vmatprep.subr.mxu0 0.0
    %1405 = vmatpush1.msra.mxu0 0.0
    %1406 = vmatprep.subr.mxu0 0.0
    %1407 = vmatpush1.msra.mxu0 0.0
    %1408 = vmatprep.subr.mxu0 0.0
    %1409 = vmatpush1.msra.mxu0 0.0
    %1410 = vmatprep.subr.mxu0 0.0
    %1411 = vmatpush1.msra.mxu0 0.0
    %1412 = vmatprep.subr.mxu0 0.0
    %1413 = vmatpush1.msra.mxu0 0.0
    %1414 = vmatprep.subr.mxu0 0.0
    %1415 = vmatpush1.msra.mxu0 0.0
    %1416 = vmatprep.subr.mxu0 0.0
    %1417 = vmatpush1.msra.mxu0 0.0
    %1418 = vmatprep.subr.mxu0 0.0
    %1419 = vmatpush1.msra.mxu0 0.0
    %1420 = vmatprep.subr.mxu0 0.0
    %1421 = vmatpush1.msra.mxu0 %v453
    %1422 = vmatprep.subr.mxu0 0.0
    %1423 = vmatpush1.msra.mxu0 %v452
    %1424 = vmatprep.subr.mxu0 0.0
    %1425 = vmatpush1.msra.mxu0 %v451
    %1426 = vmatprep.subr.mxu0 0.0
    %1427 = vmatpush1.msra.mxu0 %v450
    %1428 = vmatprep.subr.mxu0 0.0
    %1429 = vmatpush2.msra.mxu0 0.0
    %1430 = vmatprep.subr.mxu0 0.0
    %1431 = vmatpush2.msra.mxu0 0.0
    %1432 = vmatprep.subr.mxu0 0.0
    %1433 = vmatpush2.msra.mxu0 0.0
    %1434 = vmatprep.subr.mxu0 0.0
    %1435 = vmatpush2.msra.mxu0 0.0
    %1436 = vmatprep.subr.mxu0 0.0
    %1437 = vmatpush2.msra.mxu0 0.0
    %1438 = vmatprep.subr.mxu0 0.0
    %1439 = vmatpush2.msra.mxu0 0.0
    %1440 = vmatprep.subr.mxu0 0.0
    %1441 = vmatpush2.msra.mxu0 0.0
    %1442 = vmatprep.subr.mxu0 0.0
    %1443 = vmatpush2.msra.mxu0 0.0
    %1444 = vmatprep.subr.mxu0 0.0
    %1445 = vmatpush2.msra.mxu0 0.0
    %1446 = vmatprep.subr.mxu0 0.0
    %1447 = vmatpush2.msra.mxu0 0.0
    %1448 = vmatprep.subr.mxu0 0.0
    %1449 = vmatpush2.msra.mxu0 0.0
    %1450 = vmatprep.subr.mxu0 0.0
    %1451 = vmatpush2.msra.mxu0 0.0
    %1452 = vmatprep.subr.mxu0 0.0
    %1453 = vmatpush2.msra.mxu0 0.0
    %1454 = vmatprep.subr.mxu0 0.0
    %1455 = vmatpush2.msra.mxu0 0.0
    %1456 = vmatprep.subr.mxu0 0.0
    %1457 = vmatpush2.msra.mxu0 0.0
    %1458 = vmatprep.subr.mxu0 0.0
    %1459 = vmatpush2.msra.mxu0 0.0
    %1460 = vmatprep.mubr.f32.mxu0 0.0
    %1461 = vmatmul.mubr.f32.gmra.mxu0 %v1250
    %v1462 = vpop.f32.mrf.mxu0
    %v1463 = vadd.f32 0.0, %v1462
    %v1464 = vpop.f32.mrf.mxu0
    %1465 = vdwg.mxu0
    %v1466 = vadd.f32 %v1395, %v1463
    %v1467 = vld [vmem:[#allocation5 + $0x2] sm:$0x1]
    %1468 = vmatprep.subr.mxu0 0.0
    %1469 = vmatpush1.msra.mxu0 0.0
    %1470 = vmatprep.subr.mxu0 0.0
    %1471 = vmatpush1.msra.mxu0 0.0
    %1472 = vmatprep.subr.mxu0 0.0
    %1473 = vmatpush1.msra.mxu0 0.0
    %1474 = vmatprep.subr.mxu0 0.0
    %1475 = vmatpush1.msra.mxu0 0.0
    %1476 = vmatprep.subr.mxu0 0.0
    %1477 = vmatpush1.msra.mxu0 0.0
    %1478 = vmatprep.subr.mxu0 0.0
    %1479 = vmatpush1.msra.mxu0 0.0
    %1480 = vmatprep.subr.mxu0 0.0
    %1481 = vmatpush1.msra.mxu0 0.0
    %1482 = vmatprep.subr.mxu0 0.0
    %1483 = vmatpush1.msra.mxu0 0.0
    %1484 = vmatprep.subr.mxu0 0.0
    %1485 = vmatpush1.msra.mxu0 0.0
    %1486 = vmatprep.subr.mxu0 0.0
    %1487 = vmatpush1.msra.mxu0 0.0
    %1488 = vmatprep.subr.mxu0 0.0
    %1489 = vmatpush1.msra.mxu0 0.0
    %1490 = vmatprep.subr.mxu0 0.0
    %1491 = vmatpush1.msra.mxu0 0.0
    %1492 = vmatprep.subr.mxu0 0.0
    %1493 = vmatpush1.msra.mxu0 %v538
    %1494 = vmatprep.subr.mxu0 0.0
    %1495 = vmatpush1.msra.mxu0 %v537
    %1496 = vmatprep.subr.mxu0 0.0
    %1497 = vmatpush1.msra.mxu0 %v536
    %1498 = vmatprep.subr.mxu0 0.0
    %1499 = vmatpush1.msra.mxu0 %v535
    %1500 = vmatprep.subr.mxu0 0.0
    %1501 = vmatpush2.msra.mxu0 0.0
    %1502 = vmatprep.subr.mxu0 0.0
    %1503 = vmatpush2.msra.mxu0 0.0
    %1504 = vmatprep.subr.mxu0 0.0
    %1505 = vmatpush2.msra.mxu0 0.0
    %1506 = vmatprep.subr.mxu0 0.0
    %1507 = vmatpush2.msra.mxu0 0.0
    %1508 = vmatprep.subr.mxu0 0.0
    %1509 = vmatpush2.msra.mxu0 0.0
    %1510 = vmatprep.subr.mxu0 0.0
    %1511 = vmatpush2.msra.mxu0 0.0
    %1512 = vmatprep.subr.mxu0 0.0
    %1513 = vmatpush2.msra.mxu0 0.0
    %1514 = vmatprep.subr.mxu0 0.0
    %1515 = vmatpush2.msra.mxu0 0.0
    %1516 = vmatprep.subr.mxu0 0.0
    %1517 = vmatpush2.msra.mxu0 0.0
    %1518 = vmatprep.subr.mxu0 0.0
    %1519 = vmatpush2.msra.mxu0 0.0
    %1520 = vmatprep.subr.mxu0 0.0
    %1521 = vmatpush2.msra.mxu0 0.0
    %1522 = vmatprep.subr.mxu0 0.0
    %1523 = vmatpush2.msra.mxu0 0.0
    %1524 = vmatprep.subr.mxu0 0.0
    %1525 = vmatpush2.msra.mxu0 0.0
    %1526 = vmatprep.subr.mxu0 0.0
    %1527 = vmatpush2.msra.mxu0 0.0
    %1528 = vmatprep.subr.mxu0 0.0
    %1529 = vmatpush2.msra.mxu0 0.0
    %1530 = vmatprep.subr.mxu0 0.0
    %1531 = vmatpush2.msra.mxu0 0.0
    %1532 = vmatprep.mubr.f32.mxu0 0.0
    %1533 = vmatmul.mubr.f32.gmra.mxu0 %v1250
    %v1534 = vpop.f32.mrf.mxu0
    %v1535 = vadd.f32 0.0, %v1534
    %v1536 = vpop.f32.mrf.mxu0
    %1537 = vdwg.mxu0
    %v1538 = vadd.f32 %v1467, %v1535
    %v1539 = vxor.u32 %v1322, 2147483648
    %v1540 = vmul.f32 %v1539, 1.442695
    %v1541 = vpow.pop %v1540
    %v1542 = vadd.f32 %v1541, 1.0
    %v1543 = vrcp.pop %v1542
    %v1544 = vmul.f32 1.0, %v1543
    %v1545 = vxor.u32 %v1394, 2147483648
    %v1546 = vmul.f32 %v1545, 1.442695
    %v1547 = vpow.pop %v1546
    %v1548 = vadd.f32 %v1547, 1.0
    %v1549 = vrcp.pop %v1548
    %v1550 = vmul.f32 1.0, %v1549
    %v1551 = vtanh.pop %v1466
    %v1552 = vxor.u32 %v1538, 2147483648
    %v1553 = vmul.f32 %v1552, 1.442695
    %v1554 = vpow.pop %v1553
    %v1555 = vadd.f32 %v1554, 1.0
    %v1556 = vrcp.pop %v1555
    %v1557 = vmul.f32 1.0, %v1556
    %v1558 = vmul.f32 %v1550, %v1244
    %v1559 = vmul.f32 %v1544, %v1551
    %v1560 = vadd.f32 %v1558, %v1559
    %v1561 = vtanh.pop %v1560
    %v1562 = vmul.f32 %v1557, %v1561
    %1563 = vst.msk [vmem:[#allocation8 + $0x2] sm:$0x1] %vm930, %v1562
    %v1564 = vld [vmem:[#allocation2 + $0x3] sm:$0x1]
    %v1566 = vsel %vm285, %v1562, 0
    %1568 = vmatprep.subr.mxu0 0.0
    %1569 = vmatpush1.msra.mxu0 0.0
    %1570 = vmatprep.subr.mxu0 0.0
    %1571 = vmatpush1.msra.mxu0 0.0
    %1572 = vmatprep.subr.mxu0 0.0
    %1573 = vmatpush1.msra.mxu0 0.0
    %1574 = vmatprep.subr.mxu0 0.0
    %1575 = vmatpush1.msra.mxu0 0.0
    %1576 = vmatprep.subr.mxu0 0.0
    %1577 = vmatpush1.msra.mxu0 0.0
    %1578 = vmatprep.subr.mxu0 0.0
    %1579 = vmatpush1.msra.mxu0 0.0
    %1580 = vmatprep.subr.mxu0 0.0
    %1581 = vmatpush1.msra.mxu0 0.0
    %1582 = vmatprep.subr.mxu0 0.0
    %1583 = vmatpush1.msra.mxu0 0.0
    %1584 = vmatprep.subr.mxu0 0.0
    %1585 = vmatpush1.msra.mxu0 0.0
    %1586 = vmatprep.subr.mxu0 0.0
    %1587 = vmatpush1.msra.mxu0 0.0
    %1588 = vmatprep.subr.mxu0 0.0
    %1589 = vmatpush1.msra.mxu0 0.0
    %1590 = vmatprep.subr.mxu0 0.0
    %1591 = vmatpush1.msra.mxu0 0.0
    %1592 = vmatprep.subr.mxu0 0.0
    %1593 = vmatpush1.msra.mxu0 %v279
    %1594 = vmatprep.subr.mxu0 0.0
    %1595 = vmatpush1.msra.mxu0 %v278
    %1596 = vmatprep.subr.mxu0 0.0
    %1597 = vmatpush1.msra.mxu0 %v277
    %1598 = vmatprep.subr.mxu0 0.0
    %1599 = vmatpush1.msra.mxu0 %v276
    %1600 = vmatprep.subr.mxu0 0.0
    %1601 = vmatpush2.msra.mxu0 0.0
    %1602 = vmatprep.subr.mxu0 0.0
    %1603 = vmatpush2.msra.mxu0 0.0
    %1604 = vmatprep.subr.mxu0 0.0
    %1605 = vmatpush2.msra.mxu0 0.0
    %1606 = vmatprep.subr.mxu0 0.0
    %1607 = vmatpush2.msra.mxu0 0.0
    %1608 = vmatprep.subr.mxu0 0.0
    %1609 = vmatpush2.msra.mxu0 0.0
    %1610 = vmatprep.subr.mxu0 0.0
    %1611 = vmatpush2.msra.mxu0 0.0
    %1612 = vmatprep.subr.mxu0 0.0
    %1613 = vmatpush2.msra.mxu0 0.0
    %1614 = vmatprep.subr.mxu0 0.0
    %1615 = vmatpush2.msra.mxu0 0.0
    %1616 = vmatprep.subr.mxu0 0.0
    %1617 = vmatpush2.msra.mxu0 0.0
    %1618 = vmatprep.subr.mxu0 0.0
    %1619 = vmatpush2.msra.mxu0 0.0
    %1620 = vmatprep.subr.mxu0 0.0
    %1621 = vmatpush2.msra.mxu0 0.0
    %1622 = vmatprep.subr.mxu0 0.0
    %1623 = vmatpush2.msra.mxu0 0.0
    %1624 = vmatprep.subr.mxu0 0.0
    %1625 = vmatpush2.msra.mxu0 0.0
    %1626 = vmatprep.subr.mxu0 0.0
    %1627 = vmatpush2.msra.mxu0 0.0
    %1628 = vmatprep.subr.mxu0 0.0
    %1629 = vmatpush2.msra.mxu0 0.0
    %1630 = vmatprep.subr.mxu0 0.0
    %1631 = vmatpush2.msra.mxu0 0.0
    %1632 = vmatprep.mubr.f32.mxu0 0.0
    %1633 = vmatmul.mubr.f32.gmra.mxu0 %v1566
    %v1634 = vpop.f32.mrf.mxu0
    %v1635 = vadd.f32 0.0, %v1634
    %v1636 = vpop.f32.mrf.mxu0
    %1637 = vdwg.mxu0
    %v1638 = vadd.f32 %v1564, %v1635
    %v1639 = vld [vmem:[#allocation3 + $0x3] sm:$0x1]
    %1640 = vmatprep.subr.mxu0 0.0
    %1641 = vmatpush1.msra.mxu0 0.0
    %1642 = vmatprep.subr.mxu0 0.0
    %1643 = vmatpush1.msra.mxu0 0.0
    %1644 = vmatprep.subr.mxu0 0.0
    %1645 = vmatpush1.msra.mxu0 0.0
    %1646 = vmatprep.subr.mxu0 0.0
    %1647 = vmatpush1.msra.mxu0 0.0
    %1648 = vmatprep.subr.mxu0 0.0
    %1649 = vmatpush1.msra.mxu0 0.0
    %1650 = vmatprep.subr.mxu0 0.0
    %1651 = vmatpush1.msra.mxu0 0.0
    %1652 = vmatprep.subr.mxu0 0.0
    %1653 = vmatpush1.msra.mxu0 0.0
    %1654 = vmatprep.subr.mxu0 0.0
    %1655 = vmatpush1.msra.mxu0 0.0
    %1656 = vmatprep.subr.mxu0 0.0
    %1657 = vmatpush1.msra.mxu0 0.0
    %1658 = vmatprep.subr.mxu0 0.0
    %1659 = vmatpush1.msra.mxu0 0.0
    %1660 = vmatprep.subr.mxu0 0.0
    %1661 = vmatpush1.msra.mxu0 0.0
    %1662 = vmatprep.subr.mxu0 0.0
    %1663 = vmatpush1.msra.mxu0 0.0
    %1664 = vmatprep.subr.mxu0 0.0
    %1665 = vmatpush1.msra.mxu0 %v368
    %1666 = vmatprep.subr.mxu0 0.0
    %1667 = vmatpush1.msra.mxu0 %v367
    %1668 = vmatprep.subr.mxu0 0.0
    %1669 = vmatpush1.msra.mxu0 %v366
    %1670 = vmatprep.subr.mxu0 0.0
    %1671 = vmatpush1.msra.mxu0 %v365
    %1672 = vmatprep.subr.mxu0 0.0
    %1673 = vmatpush2.msra.mxu0 0.0
    %1674 = vmatprep.subr.mxu0 0.0
    %1675 = vmatpush2.msra.mxu0 0.0
    %1676 = vmatprep.subr.mxu0 0.0
    %1677 = vmatpush2.msra.mxu0 0.0
    %1678 = vmatprep.subr.mxu0 0.0
    %1679 = vmatpush2.msra.mxu0 0.0
    %1680 = vmatprep.subr.mxu0 0.0
    %1681 = vmatpush2.msra.mxu0 0.0
    %1682 = vmatprep.subr.mxu0 0.0
    %1683 = vmatpush2.msra.mxu0 0.0
    %1684 = vmatprep.subr.mxu0 0.0
    %1685 = vmatpush2.msra.mxu0 0.0
    %1686 = vmatprep.subr.mxu0 0.0
    %1687 = vmatpush2.msra.mxu0 0.0
    %1688 = vmatprep.subr.mxu0 0.0
    %1689 = vmatpush2.msra.mxu0 0.0
    %1690 = vmatprep.subr.mxu0 0.0
    %1691 = vmatpush2.msra.mxu0 0.0
    %1692 = vmatprep.subr.mxu0 0.0
    %1693 = vmatpush2.msra.mxu0 0.0
    %1694 = vmatprep.subr.mxu0 0.0
    %1695 = vmatpush2.msra.mxu0 0.0
    %1696 = vmatprep.subr.mxu0 0.0
    %1697 = vmatpush2.msra.mxu0 0.0
    %1698 = vmatprep.subr.mxu0 0.0
    %1699 = vmatpush2.msra.mxu0 0.0
    %1700 = vmatprep.subr.mxu0 0.0
    %1701 = vmatpush2.msra.mxu0 0.0
    %1702 = vmatprep.subr.mxu0 0.0
    %1703 = vmatpush2.msra.mxu0 0.0
    %1704 = vmatprep.mubr.f32.mxu0 0.0
    %1705 = vmatmul.mubr.f32.gmra.mxu0 %v1566
    %v1706 = vpop.f32.mrf.mxu0
    %v1707 = vadd.f32 0.0, %v1706
    %v1708 = vpop.f32.mrf.mxu0
    %1709 = vdwg.mxu0
    %v1710 = vadd.f32 %v1639, %v1707
    %v1711 = vld [vmem:[#allocation4 + $0x3] sm:$0x1]
    %1712 = vmatprep.subr.mxu0 0.0
    %1713 = vmatpush1.msra.mxu0 0.0
    %1714 = vmatprep.subr.mxu0 0.0
    %1715 = vmatpush1.msra.mxu0 0.0
    %1716 = vmatprep.subr.mxu0 0.0
    %1717 = vmatpush1.msra.mxu0 0.0
    %1718 = vmatprep.subr.mxu0 0.0
    %1719 = vmatpush1.msra.mxu0 0.0
    %1720 = vmatprep.subr.mxu0 0.0
    %1721 = vmatpush1.msra.mxu0 0.0
    %1722 = vmatprep.subr.mxu0 0.0
    %1723 = vmatpush1.msra.mxu0 0.0
    %1724 = vmatprep.subr.mxu0 0.0
    %1725 = vmatpush1.msra.mxu0 0.0
    %1726 = vmatprep.subr.mxu0 0.0
    %1727 = vmatpush1.msra.mxu0 0.0
    %1728 = vmatprep.subr.mxu0 0.0
    %1729 = vmatpush1.msra.mxu0 0.0
    %1730 = vmatprep.subr.mxu0 0.0
    %1731 = vmatpush1.msra.mxu0 0.0
    %1732 = vmatprep.subr.mxu0 0.0
    %1733 = vmatpush1.msra.mxu0 0.0
    %1734 = vmatprep.subr.mxu0 0.0
    %1735 = vmatpush1.msra.mxu0 0.0
    %1736 = vmatprep.subr.mxu0 0.0
    %1737 = vmatpush1.msra.mxu0 %v453
    %1738 = vmatprep.subr.mxu0 0.0
    %1739 = vmatpush1.msra.mxu0 %v452
    %1740 = vmatprep.subr.mxu0 0.0
    %1741 = vmatpush1.msra.mxu0 %v451
    %1742 = vmatprep.subr.mxu0 0.0
    %1743 = vmatpush1.msra.mxu0 %v450
    %1744 = vmatprep.subr.mxu0 0.0
    %1745 = vmatpush2.msra.mxu0 0.0
    %1746 = vmatprep.subr.mxu0 0.0
    %1747 = vmatpush2.msra.mxu0 0.0
    %1748 = vmatprep.subr.mxu0 0.0
    %1749 = vmatpush2.msra.mxu0 0.0
    %1750 = vmatprep.subr.mxu0 0.0
    %1751 = vmatpush2.msra.mxu0 0.0
    %1752 = vmatprep.subr.mxu0 0.0
    %1753 = vmatpush2.msra.mxu0 0.0
    %1754 = vmatprep.subr.mxu0 0.0
    %1755 = vmatpush2.msra.mxu0 0.0
    %1756 = vmatprep.subr.mxu0 0.0
    %1757 = vmatpush2.msra.mxu0 0.0
    %1758 = vmatprep.subr.mxu0 0.0
    %1759 = vmatpush2.msra.mxu0 0.0
    %1760 = vmatprep.subr.mxu0 0.0
    %1761 = vmatpush2.msra.mxu0 0.0
    %1762 = vmatprep.subr.mxu0 0.0
    %1763 = vmatpush2.msra.mxu0 0.0
    %1764 = vmatprep.subr.mxu0 0.0
    %1765 = vmatpush2.msra.mxu0 0.0
    %1766 = vmatprep.subr.mxu0 0.0
    %1767 = vmatpush2.msra.mxu0 0.0
    %1768 = vmatprep.subr.mxu0 0.0
    %1769 = vmatpush2.msra.mxu0 0.0
    %1770 = vmatprep.subr.mxu0 0.0
    %1771 = vmatpush2.msra.mxu0 0.0
    %1772 = vmatprep.subr.mxu0 0.0
    %1773 = vmatpush2.msra.mxu0 0.0
    %1774 = vmatprep.subr.mxu0 0.0
    %1775 = vmatpush2.msra.mxu0 0.0
    %1776 = vmatprep.mubr.f32.mxu0 0.0
    %1777 = vmatmul.mubr.f32.gmra.mxu0 %v1566
    %v1778 = vpop.f32.mrf.mxu0
    %v1779 = vadd.f32 0.0, %v1778
    %v1780 = vpop.f32.mrf.mxu0
    %1781 = vdwg.mxu0
    %v1782 = vadd.f32 %v1711, %v1779
    %v1783 = vld [vmem:[#allocation5 + $0x3] sm:$0x1]
    %1784 = vmatprep.subr.mxu0 0.0
    %1785 = vmatpush1.msra.mxu0 0.0
    %1786 = vmatprep.subr.mxu0 0.0
    %1787 = vmatpush1.msra.mxu0 0.0
    %1788 = vmatprep.subr.mxu0 0.0
    %1789 = vmatpush1.msra.mxu0 0.0
    %1790 = vmatprep.subr.mxu0 0.0
    %1791 = vmatpush1.msra.mxu0 0.0
    %1792 = vmatprep.subr.mxu0 0.0
    %1793 = vmatpush1.msra.mxu0 0.0
    %1794 = vmatprep.subr.mxu0 0.0
    %1795 = vmatpush1.msra.mxu0 0.0
    %1796 = vmatprep.subr.mxu0 0.0
    %1797 = vmatpush1.msra.mxu0 0.0
    %1798 = vmatprep.subr.mxu0 0.0
    %1799 = vmatpush1.msra.mxu0 0.0
    %1800 = vmatprep.subr.mxu0 0.0
    %1801 = vmatpush1.msra.mxu0 0.0
    %1802 = vmatprep.subr.mxu0 0.0
    %1803 = vmatpush1.msra.mxu0 0.0
    %1804 = vmatprep.subr.mxu0 0.0
    %1805 = vmatpush1.msra.mxu0 0.0
    %1806 = vmatprep.subr.mxu0 0.0
    %1807 = vmatpush1.msra.mxu0 0.0
    %1808 = vmatprep.subr.mxu0 0.0
    %1809 = vmatpush1.msra.mxu0 %v538
    %1810 = vmatprep.subr.mxu0 0.0
    %1811 = vmatpush1.msra.mxu0 %v537
    %1812 = vmatprep.subr.mxu0 0.0
    %1813 = vmatpush1.msra.mxu0 %v536
    %1814 = vmatprep.subr.mxu0 0.0
    %1815 = vmatpush1.msra.mxu0 %v535
    %1816 = vmatprep.subr.mxu0 0.0
    %1817 = vmatpush2.msra.mxu0 0.0
    %1818 = vmatprep.subr.mxu0 0.0
    %1819 = vmatpush2.msra.mxu0 0.0
    %1820 = vmatprep.subr.mxu0 0.0
    %1821 = vmatpush2.msra.mxu0 0.0
    %1822 = vmatprep.subr.mxu0 0.0
    %1823 = vmatpush2.msra.mxu0 0.0
    %1824 = vmatprep.subr.mxu0 0.0
    %1825 = vmatpush2.msra.mxu0 0.0
    %1826 = vmatprep.subr.mxu0 0.0
    %1827 = vmatpush2.msra.mxu0 0.0
    %1828 = vmatprep.subr.mxu0 0.0
    %1829 = vmatpush2.msra.mxu0 0.0
    %1830 = vmatprep.subr.mxu0 0.0
    %1831 = vmatpush2.msra.mxu0 0.0
    %1832 = vmatprep.subr.mxu0 0.0
    %1833 = vmatpush2.msra.mxu0 0.0
    %1834 = vmatprep.subr.mxu0 0.0
    %1835 = vmatpush2.msra.mxu0 0.0
    %1836 = vmatprep.subr.mxu0 0.0
    %1837 = vmatpush2.msra.mxu0 0.0
    %1838 = vmatprep.subr.mxu0 0.0
    %1839 = vmatpush2.msra.mxu0 0.0
    %1840 = vmatprep.subr.mxu0 0.0
    %1841 = vmatpush2.msra.mxu0 0.0
    %1842 = vmatprep.subr.mxu0 0.0
    %1843 = vmatpush2.msra.mxu0 0.0
    %1844 = vmatprep.subr.mxu0 0.0
    %1845 = vmatpush2.msra.mxu0 0.0
    %1846 = vmatprep.subr.mxu0 0.0
    %1847 = vmatpush2.msra.mxu0 0.0
    %1848 = vmatprep.mubr.f32.mxu0 0.0
    %1849 = vmatmul.mubr.f32.gmra.mxu0 %v1566
    %v1850 = vpop.f32.mrf.mxu0
    %v1851 = vadd.f32 0.0, %v1850
    %v1852 = vpop.f32.mrf.mxu0
    %1853 = vdwg.mxu0
    %v1854 = vadd.f32 %v1783, %v1851
    %v1855 = vxor.u32 %v1638, 2147483648
    %v1856 = vmul.f32 %v1855, 1.442695
    %v1857 = vpow.pop %v1856
    %v1858 = vadd.f32 %v1857, 1.0
    %v1859 = vrcp.pop %v1858
    %v1860 = vmul.f32 1.0, %v1859
    %v1861 = vxor.u32 %v1710, 2147483648
    %v1862 = vmul.f32 %v1861, 1.442695
    %v1863 = vpow.pop %v1862
    %v1864 = vadd.f32 %v1863, 1.0
    %v1865 = vrcp.pop %v1864
    %v1866 = vmul.f32 1.0, %v1865
    %v1867 = vtanh.pop %v1782
    %v1868 = vxor.u32 %v1854, 2147483648
    %v1869 = vmul.f32 %v1868, 1.442695
    %v1870 = vpow.pop %v1869
    %v1871 = vadd.f32 %v1870, 1.0
    %v1872 = vrcp.pop %v1871
    %v1873 = vmul.f32 1.0, %v1872
    %v1874 = vmul.f32 %v1866, %v1560
    %v1875 = vmul.f32 %v1860, %v1867
    %v1876 = vadd.f32 %v1874, %v1875
    %v1877 = vtanh.pop %v1876
    %v1878 = vmul.f32 %v1873, %v1877
    %1879 = vst.msk [vmem:[#allocation8 + $0x3] sm:$0x1] %vm930, %v1878
    // Predicated region
    $region34: #{tpu_custom_call.1} parent=1 // pred_check
      _
    $region35: #{tpu_custom_call.1} parent=1 // pred_check_branch
      %1881 = sbr.rel (0) target = $region37
    $region36: #{tpu_custom_call.1} parent=1 // pred_region
      %s1883 = ssub.s32 64, 64
      %1884 = vsyncadd [#allocation7], %s1883
      %s1886 = sshll.u32 [#allocation6], 4
      %s1887 = int_to_ptr.vmem [resolvable:$true] %s1886
      %1889 = dma.vmem_to_hbm [thread:$0]  %s1887, 64, %s8, [#allocation7]
    $region37: #{tpu_custom_call.1} parent=1 // pred_fallthru
      _
    // Predicated region
    $region38: #{tpu_custom_call.1} parent=1 // pred_check
      _
    $region39: #{tpu_custom_call.1} parent=1 // pred_check_branch
      %1891 = sbr.rel (0) target = $region41
    $region40: #{tpu_custom_call.1} parent=1 // pred_region
      %s1893 = ssub.s32 64, 64
      %1894 = vsyncadd [#allocation9], %s1893
      %s1896 = sshll.u32 [#allocation8], 4
      %s1897 = int_to_ptr.vmem [resolvable:$true] %s1896
      %1899 = dma.vmem_to_hbm [thread:$0]  %s1897, 64, %s9, [#allocation9]
    $region41: #{tpu_custom_call.1} parent=1 // pred_fallthru
      _
    // Predicated region
    $region42: #{tpu_custom_call.1} parent=1 // pred_check
      _
    $region43: #{tpu_custom_call.1} parent=1 // pred_check_branch
      %1901 = sbr.rel (0) target = $region45
    $region44: #{tpu_custom_call.1} parent=1 // pred_region
      %1902 = dma.done [#allocation7], 64
    $region45: #{tpu_custom_call.1} parent=1 // pred_fallthru
      _
    // Predicated region
    $region46: #{tpu_custom_call.1} parent=1 // pred_check
      _
    $region47: #{tpu_custom_call.1} parent=1 // pred_check_branch
      %1904 = sbr.rel (0) target = $region49
    $region48: #{tpu_custom_call.1} parent=1 // pred_region
      %1905 = dma.done [#allocation9], 64
    $region49: #{tpu_custom_call.1} parent=1 // pred_fallthru
      _
    %1906 = vsyncpa [#allocation7], 1
    %1907 = vsyncpa [#allocation9], 1

</llo_original>
